<compile_context>
chip_gen: v6e
topology: v6e:2x2x1
jax: 0.10.0
libtpu: 0.0.40
codegen_flags: <defaults>
</compile_context>

<pallas_src>
import jax
import jax.numpy as jnp
from jax.experimental import pallas as pl
from jax.experimental.pallas import tpu as pltpu

INPUT_SIZE = 784      # K
HIDDEN_SIZE = 500     # H (logical)
NUM_CLASSES = 10      # C (logical)

HIDDEN_PAD = 512      # H padded to lane multiple
CLASSES_PAD = 128     # C padded to lane multiple


def _round_up(n: int, m: int) -> int:
    return ((n + m - 1) // m) * m


def mlp_kernel(x_ref, w1_ref, b1_ref, w2_ref, b2_ref, out_ref):
    # x_ref:  (TILE_B, 784) f32/bf16   w1_ref: (784, 512) bf16   b1_ref: (1, 512) f32
    # w2_ref: (512, 128) bf16          b2_ref: (1, 128)  f32     out_ref: (TILE_B, 128) f32
    #
    # Cast after the DMA (no-op if the caller already supplies bf16); keeps the
    # x HBM transfer to a single pass at the input dtype.
    x = x_ref[...].astype(jnp.bfloat16)

    # Layer 1: Linear(784 -> 512pad) + ReLU.  MXU bf16 matmul, f32 accumulate,
    # bias add + ReLU in f32 on the VPU, then a single fused recast to bf16 so
    # only one h temp lives in VMEM.
    h = jnp.dot(x, w1_ref[...], preferred_element_type=jnp.float32)
    h = jnp.maximum(h + b1_ref[...], 0.0).astype(jnp.bfloat16)

    # Layer 2: Linear(512pad -> 128pad).  f32 accumulate + f32 bias add.
    out_ref[...] = jnp.dot(h, w2_ref[...],
                           preferred_element_type=jnp.float32) + b2_ref[...]


def prepare_params(w1, b1, w2, b2):
    """One-time parameter prep (do NOT call per forward pass).

    Takes PyTorch-convention params (w: (out, in), b: (out,)) and returns
    transposed, zero-padded, MXU-ready tensors:
      w1p: (784, 512) bf16, b1p: (1, 512) f32, w2p: (512, 128) bf16, b2p: (1, 128) f32.
    Zero padding keeps the padded math exactly equal to the 784->500->10 net.
    """
    w1p = jnp.pad(jnp.transpose(w1).astype(jnp.float32),
                  ((0, 0), (0, HIDDEN_PAD - HIDDEN_SIZE))).astype(jnp.bfloat16)
    b1p = jnp.pad(b1.astype(jnp.float32),
                  (0, HIDDEN_PAD - HIDDEN_SIZE)).reshape(1, HIDDEN_PAD)
    w2p = jnp.pad(jnp.transpose(w2).astype(jnp.float32),
                  ((0, HIDDEN_PAD - HIDDEN_SIZE),
                   (0, CLASSES_PAD - NUM_CLASSES))).astype(jnp.bfloat16)
    b2p = jnp.pad(b2.astype(jnp.float32),
                  (0, CLASSES_PAD - NUM_CLASSES)).reshape(1, CLASSES_PAD)
    return w1p, b1p, w2p, b2p


def _choose_tile_b(B: int, max_tile: int) -> int:
    """Pick a batch tile.

    Small B: one tile covering the (sublane-rounded) batch.
    Large B: multiples of 256 (full MXU row passes on v6e/v7x, 2x128 on v5e),
    capped at max_tile AND capped so the grid has >= 2 steps (lets v7x's two
    TensorCores each take work via the "parallel" batch axis).
    """
    if B <= 256:
        return _round_up(B, 8)
    tb = min(max_tile, _round_up(B, 256))
    half = _round_up((B + 1) // 2, 256)     # >= 2 grid steps when B is large
    return max(256, min(tb, half))


def neural_net_forward(x, params, *, tile_b=1024, unpad=True):
    """x: (B, 784) f32 (or bf16). params: output of prepare_params().

    Returns (B, 10) f32 logits (or the padded (Bp, 128) block if unpad=False,
    useful to keep the output lane-dense for a fused downstream consumer).
    """
    w1p, b1p, w2p, b2p = params
    B = x.shape[0]

    tb = _choose_tile_b(B, tile_b)
    Bp = _round_up(B, tb)
    if Bp != B:
        # Only materialized on the ragged case; garbage rows produce garbage
        # outputs beyond B which are never consumed.
        x = jnp.pad(x, ((0, Bp - B), (0, 0)))

    grid = (Bp // tb,)
    x_bytes = jnp.dtype(x.dtype).itemsize

    flops = 2 * Bp * INPUT_SIZE * HIDDEN_PAD + 2 * Bp * HIDDEN_PAD * CLASSES_PAD
    bytes_accessed = (Bp * INPUT_SIZE * x_bytes + w1p.size * 2 + w2p.size * 2 +
                      b1p.size * 4 + b2p.size * 4 + Bp * CLASSES_PAD * 4)
    cost = pl.CostEstimate(flops=flops, transcendentals=0,
                           bytes_accessed=bytes_accessed)

    # Rough per-step VMEM working set (double-buffered x/out tiles, resident
    # weights, f32 + bf16 h temps).  Raise the scoped limit only when needed.
    vmem_est = (2 * tb * INPUT_SIZE * x_bytes            # x tile x2
                + 2 * tb * CLASSES_PAD * 4               # out tile x2
                + 2 * (w1p.size * 2 + w2p.size * 2)      # weights x2 bufs
                + tb * HIDDEN_PAD * (4 + 2))             # h temps
    cp_kwargs = dict(dimension_semantics=("parallel",))
    if vmem_est > 24 * 1024 * 1024:
        cp_kwargs["vmem_limit_bytes"] = min(int(vmem_est * 1.5), 100 * 1024 * 1024)

    out_padded = pl.pallas_call(
        mlp_kernel,
        out_shape=jax.ShapeDtypeStruct((Bp, CLASSES_PAD), jnp.float32),
        grid=grid,
        in_specs=[
            pl.BlockSpec((tb, INPUT_SIZE), lambda i: (i, 0)),          # x tile
            pl.BlockSpec((INPUT_SIZE, HIDDEN_PAD), lambda i: (0, 0)),  # w1 resident
            pl.BlockSpec((1, HIDDEN_PAD), lambda i: (0, 0)),           # b1 resident
            pl.BlockSpec((HIDDEN_PAD, CLASSES_PAD), lambda i: (0, 0)), # w2 resident
            pl.BlockSpec((1, CLASSES_PAD), lambda i: (0, 0)),          # b2 resident
        ],
        out_specs=pl.BlockSpec((tb, CLASSES_PAD), lambda i: (i, 0)),
        compiler_params=pltpu.CompilerParams(**cp_kwargs),
        cost_estimate=cost,
    )(x, w1p, b1p, w2p, b2p)

    if not unpad:
        return out_padded
    return out_padded[:B, :NUM_CLASSES]


def init_params(key):
    """Deterministic init mimicking nn.Linear's uniform(-1/sqrt(fan_in), 1/sqrt(fan_in))."""
    k1, k2, k3, k4 = jax.random.split(key, 4)
    bound1 = 1.0 / jnp.sqrt(INPUT_SIZE)
    bound2 = 1.0 / jnp.sqrt(HIDDEN_SIZE)
    w1 = jax.random.uniform(k1, (HIDDEN_SIZE, INPUT_SIZE), jnp.float32, -bound1, bound1)
    b1 = jax.random.uniform(k2, (HIDDEN_SIZE,), jnp.float32, -bound1, bound1)
    w2 = jax.random.uniform(k3, (NUM_CLASSES, HIDDEN_SIZE), jnp.float32, -bound2, bound2)
    b2 = jax.random.uniform(k4, (NUM_CLASSES,), jnp.float32, -bound2, bound2)
    return w1, b1, w2, b2


if __name__ == "__main__":
    key = jax.random.PRNGKey(0)
    k_params, k_x = jax.random.split(key)
    w1, b1, w2, b2 = init_params(k_params)

    # One-time parameter preparation (transpose + pad + bf16 cast).
    params = prepare_params(w1, b1, w2, b2)

    batch = 8
    x = jax.random.normal(k_x, (batch, INPUT_SIZE), jnp.float32)

    fwd = jax.jit(neural_net_forward, static_argnames=("tile_b", "unpad"))
    out = fwd(x, params)
    out = jax.block_until_ready(out)

    # Sanity check against plain-JAX f32 reference (loose tolerance: matmul
    # inputs are bf16 with f32 accumulation).
    ref = jnp.maximum(x @ w1.T + b1, 0.0) @ w2.T + b2
    assert out.shape == (batch, NUM_CLASSES)
    assert jnp.allclose(out, ref, atol=5e-2, rtol=5e-2), (
        float(jnp.max(jnp.abs(out - ref))))

    print("KERNEL_OK")
</pallas_src>

<mosaic_0001>
module attributes {stable_mosaic.version = 11 : i64} {
  func.func @mlp_kernel(%arg0: i32, %arg1: memref<8x784xf32, #tpu.memory_space<vmem>>, %arg2: memref<784x512xbf16, #tpu.memory_space<vmem>>, %arg3: memref<1x512xf32, #tpu.memory_space<vmem>>, %arg4: memref<512x128xbf16, #tpu.memory_space<vmem>>, %arg5: memref<1x128xf32, #tpu.memory_space<vmem>>, %arg6: memref<8x128xf32, #tpu.memory_space<vmem>>) attributes {dimension_semantics = [#tpu.dimension_semantics<parallel>], iteration_bounds = array<i64: 1>, scalar_prefetch = 0 : i64, scratch_operands = 0 : i64, tpu.core_type = #tpu.core_type<tc>, window_params = [{transform_indices = @transform_0, window_bounds = array<i64: 8, 784>}, {pipeline_mode = #tpu.pipeline_mode<synchronous>, transform_indices = @transform_1, window_bounds = array<i64: 784, 512>}, {pipeline_mode = #tpu.pipeline_mode<synchronous>, transform_indices = @transform_2, window_bounds = array<i64: 1, 512>}, {pipeline_mode = #tpu.pipeline_mode<synchronous>, transform_indices = @transform_3, window_bounds = array<i64: 512, 128>}, {pipeline_mode = #tpu.pipeline_mode<synchronous>, transform_indices = @transform_4, window_bounds = array<i64: 1, 128>}, {transform_indices = @transform_5, window_bounds = array<i64: 8, 128>}]} {
    %c0 = arith.constant 0 : index
    %c0_0 = arith.constant 0 : index
    %0 = vector.load %arg1[%c0, %c0_0] : memref<8x784xf32, #tpu.memory_space<vmem>>, vector<8x784xf32>
    %1 = arith.truncf %0 : vector<8x784xf32> to vector<8x784xbf16>
    %c0_1 = arith.constant 0 : index
    %c0_2 = arith.constant 0 : index
    %2 = vector.load %arg2[%c0_1, %c0_2] : memref<784x512xbf16, #tpu.memory_space<vmem>>, vector<784x512xbf16>
    %cst = arith.constant dense<0.000000e+00> : vector<8x512xf32>
    %3 = tpu.matmul %1, %2, %cst {dimension_numbers = #tpu.dot_dimension_numbers<[1], [0], [0], [1], [0, 0, 1, 1], [], []>} : vector<8x784xbf16>, vector<784x512xbf16>, vector<8x512xf32> -> vector<8x512xf32>
    %c0_3 = arith.constant 0 : index
    %c0_4 = arith.constant 0 : index
    %4 = vector.load %arg3[%c0_3, %c0_4] : memref<1x512xf32, #tpu.memory_space<vmem>>, vector<1x512xf32>
    %5 = vector.broadcast %4 : vector<1x512xf32> to vector<8x512xf32>
    %6 = arith.addf %3, %5 : vector<8x512xf32>
    %cst_5 = arith.constant 0.000000e+00 : f32
    %7 = vector.broadcast %cst_5 : f32 to vector<8x512xf32>
    %8 = arith.maximumf %6, %7 : vector<8x512xf32>
    %9 = arith.truncf %8 : vector<8x512xf32> to vector<8x512xbf16>
    %c0_6 = arith.constant 0 : index
    %c0_7 = arith.constant 0 : index
    %10 = vector.load %arg4[%c0_6, %c0_7] : memref<512x128xbf16, #tpu.memory_space<vmem>>, vector<512x128xbf16>
    %cst_8 = arith.constant dense<0.000000e+00> : vector<8x128xf32>
    %11 = tpu.matmul %9, %10, %cst_8 {dimension_numbers = #tpu.dot_dimension_numbers<[1], [0], [0], [1], [0, 0, 1, 1], [], []>} : vector<8x512xbf16>, vector<512x128xbf16>, vector<8x128xf32> -> vector<8x128xf32>
    %c0_9 = arith.constant 0 : index
    %c0_10 = arith.constant 0 : index
    %12 = vector.load %arg5[%c0_9, %c0_10] : memref<1x128xf32, #tpu.memory_space<vmem>>, vector<1x128xf32>
    %13 = vector.broadcast %12 : vector<1x128xf32> to vector<8x128xf32>
    %14 = arith.addf %11, %13 : vector<8x128xf32>
    %c0_11 = arith.constant 0 : index
    %c0_12 = arith.constant 0 : index
    %15 = vector.load %arg6[%c0_11, %c0_12] : memref<8x128xf32, #tpu.memory_space<vmem>>, vector<8x128xf32>
    tpu.vector_store %arg6[%c0_11, %c0_12], %14 {strides = array<i32>} : memref<8x128xf32, #tpu.memory_space<vmem>>, vector<8x128xf32>,
    return
  }
  func.func @transform_0(%arg0: i32) -> (i32, i32) {
    %c0_i32 = arith.constant 0 : i32
    %c0_i32_0 = arith.constant 0 : i32
    return %arg0, %c0_i32 : i32, i32
  }
  func.func @transform_1(%arg0: i32) -> (i32, i32) {
    %c0_i32 = arith.constant 0 : i32
    %c0_i32_0 = arith.constant 0 : i32
    %c0_i32_1 = arith.constant 0 : i32
    return %c0_i32, %c0_i32_0 : i32, i32
  }
  func.func @transform_2(%arg0: i32) -> (i32, i32) {
    %c0_i32 = arith.constant 0 : i32
    %c0_i32_0 = arith.constant 0 : i32
    %c0_i32_1 = arith.constant 0 : i32
    return %c0_i32, %c0_i32_0 : i32, i32
  }
  func.func @transform_3(%arg0: i32) -> (i32, i32) {
    %c0_i32 = arith.constant 0 : i32
    %c0_i32_0 = arith.constant 0 : i32
    %c0_i32_1 = arith.constant 0 : i32
    return %c0_i32, %c0_i32_0 : i32, i32
  }
  func.func @transform_4(%arg0: i32) -> (i32, i32) {
    %c0_i32 = arith.constant 0 : i32
    %c0_i32_0 = arith.constant 0 : i32
    %c0_i32_1 = arith.constant 0 : i32
    return %c0_i32, %c0_i32_0 : i32, i32
  }
  func.func @transform_5(%arg0: i32) -> (i32, i32) {
    %c0_i32 = arith.constant 0 : i32
    %c0_i32_0 = arith.constant 0 : i32
    return %arg0, %c0_i32 : i32, i32
  }
}

</mosaic_0001>

<llo_original>
// kernel: neural_net_forward.1
$region0: #{neural_net_forward.1}
  #allocation0 [shape = 'u32[]', space=smem, size = 0x4, offset = 0x4, fixed_abs, tag = 'smem constant byte address 0x4 - core index']
  #allocation1 [shape = 'u32[144,128]{1,0:T(1,128)}', space=vmem, size = 0x12000, scoped, tag = 'internal scratch']
  %s0 = inlined_call_operand.hbm [shape: f32[8,784], index: 0, kind: input, shape index: {}]
  %s1 = inlined_call_operand.hbm [shape: bf16[784,512], index: 1, kind: input, shape index: {}]
  %s2 = inlined_call_operand.hbm [shape: f32[1,512], index: 2, kind: input, shape index: {}]
  %s3 = inlined_call_operand.hbm [shape: bf16[512,128], index: 3, kind: input, shape index: {}]
  %s4 = inlined_call_operand.vmem [shape: f32[1,128], index: 4, kind: input, shape index: {}]
  %s5 = inlined_call_operand.hbm [shape: f32[8,128], index: 5, kind: output, shape index: {}]
  %s6 = sld [smem:[#allocation0]]
  $region46: #{neural_net_forward.1} parent=0
    _
  %s8 = ssub.s32 1, %s6
  %s9 = scalar_select 0, %s8, %s6
  $region1: #{neural_net_forward.1} parent=0
    #allocation2 [shape = 'u8[28672]{0}', space=vmem, size = 0x7000, scoped, tag = 'input window, operand 0, single buffered']
    #allocation3 [shape = 's32[1]{0}', space=sflag, size = 0x4, scoped, tag = 'scoped memory for neural_net_forward.1']
    #allocation4 [shape = 's32[1]{0}', space=sflag, size = 0x4, scoped, tag = 'scoped memory for neural_net_forward.1']
    #allocation5 [shape = 'u8[802816]{0}', space=vmem, size = 0xc4000, scoped, tag = 'input window, operand 1, single buffered']
    #allocation6 [shape = 's32[1]{0}', space=sflag, size = 0x4, scoped, tag = 'scoped memory for neural_net_forward.1']
    #allocation7 [shape = 'u8[2048]{0}', space=vmem, size = 0x800, scoped, tag = 'input window, operand 2, single buffered']
    #allocation8 [shape = 'u8[131072]{0}', space=vmem, size = 0x20000, scoped, tag = 'input window, operand 3, single buffered']
    #allocation9 [shape = 's32[1]{0}', space=sflag, size = 0x4, scoped, tag = 'scoped memory for neural_net_forward.1']
    #allocation10 [shape = 'u8[4096]{0}', space=vmem, size = 0x1000, scoped, tag = 'output window, operand 0, single buffered']
    %10 = vsyncpa [#allocation3], 0
    %11 = vsyncpa [#allocation6], 0
    %12 = vsyncpa [#allocation9], 0
    %13 = vsyncpa [#allocation4], 0
    // Predicated region
    $region2: #{neural_net_forward.1} parent=1 // pred_check
      _
    $region3: #{neural_net_forward.1} parent=1 // pred_check_branch
      %15 = sbr.rel (0) target = $region5
    $region4: #{neural_net_forward.1} parent=1 // pred_region
      %s17 = ssub.s32 896, 896
      %18 = vsyncadd [#allocation3], %s17
      %s20 = sshll.u32 [#allocation2], 4
      %s21 = int_to_ptr.vmem [resolvable:$true] %s20
      %23 = dma.hbm_to_vmem [thread:$0]  %s0, 896, %s21, [#allocation3]
    $region5: #{neural_net_forward.1} parent=1 // pred_fallthru
      _
    // Predicated region
    $region6: #{neural_net_forward.1} parent=1 // pred_check
      _
    $region7: #{neural_net_forward.1} parent=1 // pred_check_branch
      %25 = sbr.rel (0) target = $region9
    $region8: #{neural_net_forward.1} parent=1 // pred_region
      %s27 = ssub.s32 25088, 25088
      %28 = vsyncadd [#allocation6], %s27
      %s29 = sshll.u32 [#allocation5], 4
      %s30 = int_to_ptr.vmem [resolvable:$true] %s29
      %35 = dma.hbm_to_vmem [thread:$0]  %s1, 25088, %s30, [#allocation6], 256, 256, 16
    $region9: #{neural_net_forward.1} parent=1 // pred_fallthru
      _
    // Predicated region
    $region10: #{neural_net_forward.1} parent=1 // pred_check
      _
    $region11: #{neural_net_forward.1} parent=1 // pred_check_branch
      %37 = sbr.rel (0) target = $region13
    $region12: #{neural_net_forward.1} parent=1 // pred_region
      %s39 = ssub.s32 64, 64
      %40 = vsyncadd [#allocation6], %s39
      %s42 = sshll.u32 [#allocation7], 4
      %s43 = int_to_ptr.vmem [resolvable:$true] %s42
      %45 = dma.hbm_to_vmem [thread:$0]  %s2, 64, %s43, [#allocation6]
    $region13: #{neural_net_forward.1} parent=1 // pred_fallthru
      _
    // Predicated region
    $region14: #{neural_net_forward.1} parent=1 // pred_check
      _
    $region15: #{neural_net_forward.1} parent=1 // pred_check_branch
      %47 = sbr.rel (0) target = $region17
    $region16: #{neural_net_forward.1} parent=1 // pred_region
      %s49 = ssub.s32 4096, 4096
      %50 = vsyncadd [#allocation9], %s49
      %s51 = sshll.u32 [#allocation8], 4
      %s52 = int_to_ptr.vmem [resolvable:$true] %s51
      %57 = dma.hbm_to_vmem [thread:$0]  %s3, 4096, %s52, [#allocation9], 64, 64, 4
    $region17: #{neural_net_forward.1} parent=1 // pred_fallthru
      _
    // Predicated region
    $region18: #{neural_net_forward.1} parent=1 // pred_check
      _
    $region19: #{neural_net_forward.1} parent=1 // pred_check_branch
      %59 = sbr.rel (0) target = $region21
    $region20: #{neural_net_forward.1} parent=1 // pred_region
      _
    $region21: #{neural_net_forward.1} parent=1 // pred_fallthru
      _
    // Predicated region
    $region22: #{neural_net_forward.1} parent=1 // pred_check
      _
    $region23: #{neural_net_forward.1} parent=1 // pred_check_branch
      %61 = sbr.rel (0) target = $region25
    $region24: #{neural_net_forward.1} parent=1 // pred_region
      %62 = dma.done [#allocation3], 896
    $region25: #{neural_net_forward.1} parent=1 // pred_fallthru
      _
    // Predicated region
    $region26: #{neural_net_forward.1} parent=1 // pred_check
      _
    $region27: #{neural_net_forward.1} parent=1 // pred_check_branch
      %64 = sbr.rel (0) target = $region29
    $region28: #{neural_net_forward.1} parent=1 // pred_region
      %65 = dma.done [#allocation6], 25088
    $region29: #{neural_net_forward.1} parent=1 // pred_fallthru
      _
    // Predicated region
    $region30: #{neural_net_forward.1} parent=1 // pred_check
      _
    $region31: #{neural_net_forward.1} parent=1 // pred_check_branch
      %67 = sbr.rel (0) target = $region33
    $region32: #{neural_net_forward.1} parent=1 // pred_region
      %68 = dma.done [#allocation6], 64
    $region33: #{neural_net_forward.1} parent=1 // pred_fallthru
      _
    // Predicated region
    $region34: #{neural_net_forward.1} parent=1 // pred_check
      _
    $region35: #{neural_net_forward.1} parent=1 // pred_check_branch
      %70 = sbr.rel (0) target = $region37
    $region36: #{neural_net_forward.1} parent=1 // pred_region
      %71 = dma.done [#allocation9], 4096
    $region37: #{neural_net_forward.1} parent=1 // pred_fallthru
      _
    %v73 = vld [vmem:[#allocation2] sm:$0xff]
    %v74 = vld [vmem:[#allocation2 + $0x8] sm:$0xff]
    %v75 = vld [vmem:[#allocation2 + $0x10] sm:$0xff]
    %v76 = vld [vmem:[#allocation2 + $0x18] sm:$0xff]
    %v77 = vld [vmem:[#allocation2 + $0x20] sm:$0xff]
    %v78 = vld [vmem:[#allocation2 + $0x28] sm:$0xff]
    %v79 = vld [vmem:[#allocation2 + $0x30] sm:$0xff]
    %v80 = vpack.c.bf16 %v73, %v73
    %v81 = vpack.c.bf16 %v74, %v74
    %v82 = vpack.c.bf16 %v75, %v75
    %v83 = vpack.c.bf16 %v76, %v76
    %v84 = vpack.c.bf16 %v77, %v77
    %v85 = vpack.c.bf16 %v78, %v78
    %v86 = vpack.c.bf16 %v79, %v79
    %v87 = vld [vmem:[#allocation5] sm:$0xff]
    %v88 = vld [vmem:[#allocation5 + $0x8] sm:$0xff]
    %v89 = vld [vmem:[#allocation5 + $0x10] sm:$0xff]
    %v90 = vld [vmem:[#allocation5 + $0x18] sm:$0xff]
    %v91 = vld [vmem:[#allocation5 + $0x20] sm:$0xff]
    %v92 = vld [vmem:[#allocation5 + $0x28] sm:$0xff]
    %v93 = vld [vmem:[#allocation5 + $0x30] sm:$0xff]
    %v94 = vld [vmem:[#allocation5 + $0x38] sm:$0xff]
    %v95 = vld [vmem:[#allocation5 + $0x40] sm:$0xff]
    %v96 = vld [vmem:[#allocation5 + $0x48] sm:$0xff]
    %v97 = vld [vmem:[#allocation5 + $0x50] sm:$0xff]
    %v98 = vld [vmem:[#allocation5 + $0x58] sm:$0xff]
    %v99 = vld [vmem:[#allocation5 + $0x60] sm:$0xff]
    %v100 = vld [vmem:[#allocation5 + $0x68] sm:$0xff]
    %v101 = vld [vmem:[#allocation5 + $0x70] sm:$0xff]
    %v102 = vld [vmem:[#allocation5 + $0x78] sm:$0xff]
    %v103 = vld [vmem:[#allocation5 + $0x80] sm:$0xff]
    %v104 = vld [vmem:[#allocation5 + $0x88] sm:$0xff]
    %v105 = vld [vmem:[#allocation5 + $0x90] sm:$0xff]
    %v106 = vld [vmem:[#allocation5 + $0x98] sm:$0xff]
    %v107 = vld [vmem:[#allocation5 + $0xa0] sm:$0xff]
    %v108 = vld [vmem:[#allocation5 + $0xa8] sm:$0xff]
    %v109 = vld [vmem:[#allocation5 + $0xb0] sm:$0xff]
    %v110 = vld [vmem:[#allocation5 + $0xb8] sm:$0xff]
    %v111 = vld [vmem:[#allocation5 + $0xc0] sm:$0xff]
    %v112 = vld [vmem:[#allocation5 + $0xc8] sm:$0xff]
    %v113 = vld [vmem:[#allocation5 + $0xd0] sm:$0xff]
    %v114 = vld [vmem:[#allocation5 + $0xd8] sm:$0xff]
    %v115 = vld [vmem:[#allocation5 + $0xe0] sm:$0xff]
    %v116 = vld [vmem:[#allocation5 + $0xe8] sm:$0xff]
    %v117 = vld [vmem:[#allocation5 + $0xf0] sm:$0xff]
    %v118 = vld [vmem:[#allocation5 + $0xf8] sm:$0xff]
    %v119 = vld [vmem:[#allocation5 + $0x100] sm:$0xff]
    %v120 = vld [vmem:[#allocation5 + $0x108] sm:$0xff]
    %v121 = vld [vmem:[#allocation5 + $0x110] sm:$0xff]
    %v122 = vld [vmem:[#allocation5 + $0x118] sm:$0xff]
    %v123 = vld [vmem:[#allocation5 + $0x120] sm:$0xff]
    %v124 = vld [vmem:[#allocation5 + $0x128] sm:$0xff]
    %v125 = vld [vmem:[#allocation5 + $0x130] sm:$0xff]
    %v126 = vld [vmem:[#allocation5 + $0x138] sm:$0xff]
    %v127 = vld [vmem:[#allocation5 + $0x140] sm:$0xff]
    %v128 = vld [vmem:[#allocation5 + $0x148] sm:$0xff]
    %v129 = vld [vmem:[#allocation5 + $0x150] sm:$0xff]
    %v130 = vld [vmem:[#allocation5 + $0x158] sm:$0xff]
    %v131 = vld [vmem:[#allocation5 + $0x160] sm:$0xff]
    %v132 = vld [vmem:[#allocation5 + $0x168] sm:$0xff]
    %v133 = vld [vmem:[#allocation5 + $0x170] sm:$0xff]
    %v134 = vld [vmem:[#allocation5 + $0x178] sm:$0xff]
    %v135 = vld [vmem:[#allocation5 + $0x180] sm:$0xff]
    %v136 = vld [vmem:[#allocation5 + $0x188] sm:$0xff]
    %v137 = vld [vmem:[#allocation5 + $0x190] sm:$0xff]
    %v138 = vld [vmem:[#allocation5 + $0x198] sm:$0xff]
    %v139 = vld [vmem:[#allocation5 + $0x1a0] sm:$0xff]
    %v140 = vld [vmem:[#allocation5 + $0x1a8] sm:$0xff]
    %v141 = vld [vmem:[#allocation5 + $0x1b0] sm:$0xff]
    %v142 = vld [vmem:[#allocation5 + $0x1b8] sm:$0xff]
    %v143 = vld [vmem:[#allocation5 + $0x1c0] sm:$0xff]
    %v144 = vld [vmem:[#allocation5 + $0x1c8] sm:$0xff]
    %v145 = vld [vmem:[#allocation5 + $0x1d0] sm:$0xff]
    %v146 = vld [vmem:[#allocation5 + $0x1d8] sm:$0xff]
    %v147 = vld [vmem:[#allocation5 + $0x1e0] sm:$0xff]
    %v148 = vld [vmem:[#allocation5 + $0x1e8] sm:$0xff]
    %v149 = vld [vmem:[#allocation5 + $0x1f0] sm:$0xff]
    %v150 = vld [vmem:[#allocation5 + $0x1f8] sm:$0xff]
    %v151 = vld [vmem:[#allocation5 + $0x200] sm:$0xff]
    %v152 = vld [vmem:[#allocation5 + $0x208] sm:$0xff]
    %v153 = vld [vmem:[#allocation5 + $0x210] sm:$0xff]
    %v154 = vld [vmem:[#allocation5 + $0x218] sm:$0xff]
    %v155 = vld [vmem:[#allocation5 + $0x220] sm:$0xff]
    %v156 = vld [vmem:[#allocation5 + $0x228] sm:$0xff]
    %v157 = vld [vmem:[#allocation5 + $0x230] sm:$0xff]
    %v158 = vld [vmem:[#allocation5 + $0x238] sm:$0xff]
    %v159 = vld [vmem:[#allocation5 + $0x240] sm:$0xff]
    %v160 = vld [vmem:[#allocation5 + $0x248] sm:$0xff]
    %v161 = vld [vmem:[#allocation5 + $0x250] sm:$0xff]
    %v162 = vld [vmem:[#allocation5 + $0x258] sm:$0xff]
    %v163 = vld [vmem:[#allocation5 + $0x260] sm:$0xff]
    %v164 = vld [vmem:[#allocation5 + $0x268] sm:$0xff]
    %v165 = vld [vmem:[#allocation5 + $0x270] sm:$0xff]
    %v166 = vld [vmem:[#allocation5 + $0x278] sm:$0xff]
    %v167 = vld [vmem:[#allocation5 + $0x280] sm:$0xff]
    %v168 = vld [vmem:[#allocation5 + $0x288] sm:$0xff]
    %v169 = vld [vmem:[#allocation5 + $0x290] sm:$0xff]
    %v170 = vld [vmem:[#allocation5 + $0x298] sm:$0xff]
    %v171 = vld [vmem:[#allocation5 + $0x2a0] sm:$0xff]
    %v172 = vld [vmem:[#allocation5 + $0x2a8] sm:$0xff]
    %v173 = vld [vmem:[#allocation5 + $0x2b0] sm:$0xff]
    %v174 = vld [vmem:[#allocation5 + $0x2b8] sm:$0xff]
    %v175 = vld [vmem:[#allocation5 + $0x2c0] sm:$0xff]
    %v176 = vld [vmem:[#allocation5 + $0x2c8] sm:$0xff]
    %v177 = vld [vmem:[#allocation5 + $0x2d0] sm:$0xff]
    %v178 = vld [vmem:[#allocation5 + $0x2d8] sm:$0xff]
    %v179 = vld [vmem:[#allocation5 + $0x2e0] sm:$0xff]
    %v180 = vld [vmem:[#allocation5 + $0x2e8] sm:$0xff]
    %v181 = vld [vmem:[#allocation5 + $0x2f0] sm:$0xff]
    %v182 = vld [vmem:[#allocation5 + $0x2f8] sm:$0xff]
    %v183 = vld [vmem:[#allocation5 + $0x300] sm:$0xff]
    %v184 = vld [vmem:[#allocation5 + $0x308] sm:$0xff]
    %v185 = vld [vmem:[#allocation5 + $0x310] sm:$0xff]
    %v186 = vld [vmem:[#allocation5 + $0x318] sm:$0xff]
    %v187 = vld [vmem:[#allocation5 + $0x320] sm:$0xff]
    %v188 = vld [vmem:[#allocation5 + $0x328] sm:$0xff]
    %v189 = vld [vmem:[#allocation5 + $0x330] sm:$0xff]
    %v190 = vld [vmem:[#allocation5 + $0x338] sm:$0xff]
    %v191 = vld [vmem:[#allocation5 + $0x340] sm:$0xff]
    %v192 = vld [vmem:[#allocation5 + $0x348] sm:$0xff]
    %v193 = vld [vmem:[#allocation5 + $0x350] sm:$0xff]
    %v194 = vld [vmem:[#allocation5 + $0x358] sm:$0xff]
    %v195 = vld [vmem:[#allocation5 + $0x360] sm:$0xff]
    %v196 = vld [vmem:[#allocation5 + $0x368] sm:$0xff]
    %v197 = vld [vmem:[#allocation5 + $0x370] sm:$0xff]
    %v198 = vld [vmem:[#allocation5 + $0x378] sm:$0xff]
    %v199 = vld [vmem:[#allocation5 + $0x380] sm:$0xff]
    %v200 = vld [vmem:[#allocation5 + $0x388] sm:$0xff]
    %v201 = vld [vmem:[#allocation5 + $0x390] sm:$0xff]
    %v202 = vld [vmem:[#allocation5 + $0x398] sm:$0xff]
    %v203 = vld [vmem:[#allocation5 + $0x3a0] sm:$0xff]
    %v204 = vld [vmem:[#allocation5 + $0x3a8] sm:$0xff]
    %v205 = vld [vmem:[#allocation5 + $0x3b0] sm:$0xff]
    %v206 = vld [vmem:[#allocation5 + $0x3b8] sm:$0xff]
    %v207 = vld [vmem:[#allocation5 + $0x3c0] sm:$0xff]
    %v208 = vld [vmem:[#allocation5 + $0x3c8] sm:$0xff]
    %v209 = vld [vmem:[#allocation5 + $0x3d0] sm:$0xff]
    %v210 = vld [vmem:[#allocation5 + $0x3d8] sm:$0xff]
    %v211 = vld [vmem:[#allocation5 + $0x3e0] sm:$0xff]
    %v212 = vld [vmem:[#allocation5 + $0x3e8] sm:$0xff]
    %v213 = vld [vmem:[#allocation5 + $0x3f0] sm:$0xff]
    %v214 = vld [vmem:[#allocation5 + $0x3f8] sm:$0xff]
    %v215 = vld [vmem:[#allocation5 + $0x400] sm:$0xff]
    %v216 = vld [vmem:[#allocation5 + $0x408] sm:$0xff]
    %v217 = vld [vmem:[#allocation5 + $0x410] sm:$0xff]
    %v218 = vld [vmem:[#allocation5 + $0x418] sm:$0xff]
    %v219 = vld [vmem:[#allocation5 + $0x420] sm:$0xff]
    %v220 = vld [vmem:[#allocation5 + $0x428] sm:$0xff]
    %v221 = vld [vmem:[#allocation5 + $0x430] sm:$0xff]
    %v222 = vld [vmem:[#allocation5 + $0x438] sm:$0xff]
    %v223 = vld [vmem:[#allocation5 + $0x440] sm:$0xff]
    %v224 = vld [vmem:[#allocation5 + $0x448] sm:$0xff]
    %v225 = vld [vmem:[#allocation5 + $0x450] sm:$0xff]
    %v226 = vld [vmem:[#allocation5 + $0x458] sm:$0xff]
    %v227 = vld [vmem:[#allocation5 + $0x460] sm:$0xff]
    %v228 = vld [vmem:[#allocation5 + $0x468] sm:$0xff]
    %v229 = vld [vmem:[#allocation5 + $0x470] sm:$0xff]
    %v230 = vld [vmem:[#allocation5 + $0x478] sm:$0xff]
    %v231 = vld [vmem:[#allocation5 + $0x480] sm:$0xff]
    %v232 = vld [vmem:[#allocation5 + $0x488] sm:$0xff]
    %v233 = vld [vmem:[#allocation5 + $0x490] sm:$0xff]
    %v234 = vld [vmem:[#allocation5 + $0x498] sm:$0xff]
    %v235 = vld [vmem:[#allocation5 + $0x4a0] sm:$0xff]
    %v236 = vld [vmem:[#allocation5 + $0x4a8] sm:$0xff]
    %v237 = vld [vmem:[#allocation5 + $0x4b0] sm:$0xff]
    %v238 = vld [vmem:[#allocation5 + $0x4b8] sm:$0xff]
    %v239 = vld [vmem:[#allocation5 + $0x4c0] sm:$0xff]
    %v240 = vld [vmem:[#allocation5 + $0x4c8] sm:$0xff]
    %v241 = vld [vmem:[#allocation5 + $0x4d0] sm:$0xff]
    %v242 = vld [vmem:[#allocation5 + $0x4d8] sm:$0xff]
    %v243 = vld [vmem:[#allocation5 + $0x4e0] sm:$0xff]
    %v244 = vld [vmem:[#allocation5 + $0x4e8] sm:$0xff]
    %v245 = vld [vmem:[#allocation5 + $0x4f0] sm:$0xff]
    %v246 = vld [vmem:[#allocation5 + $0x4f8] sm:$0xff]
    %v247 = vld [vmem:[#allocation5 + $0x500] sm:$0xff]
    %v248 = vld [vmem:[#allocation5 + $0x508] sm:$0xff]
    %v249 = vld [vmem:[#allocation5 + $0x510] sm:$0xff]
    %v250 = vld [vmem:[#allocation5 + $0x518] sm:$0xff]
    %v251 = vld [vmem:[#allocation5 + $0x520] sm:$0xff]
    %v252 = vld [vmem:[#allocation5 + $0x528] sm:$0xff]
    %v253 = vld [vmem:[#allocation5 + $0x530] sm:$0xff]
    %v254 = vld [vmem:[#allocation5 + $0x538] sm:$0xff]
    %v255 = vld [vmem:[#allocation5 + $0x540] sm:$0xff]
    %v256 = vld [vmem:[#allocation5 + $0x548] sm:$0xff]
    %v257 = vld [vmem:[#allocation5 + $0x550] sm:$0xff]
    %v258 = vld [vmem:[#allocation5 + $0x558] sm:$0xff]
    %v259 = vld [vmem:[#allocation5 + $0x560] sm:$0xff]
    %v260 = vld [vmem:[#allocation5 + $0x568] sm:$0xff]
    %v261 = vld [vmem:[#allocation5 + $0x570] sm:$0xff]
    %v262 = vld [vmem:[#allocation5 + $0x578] sm:$0xff]
    %v263 = vld [vmem:[#allocation5 + $0x580] sm:$0xff]
    %v264 = vld [vmem:[#allocation5 + $0x588] sm:$0xff]
    %v265 = vld [vmem:[#allocation5 + $0x590] sm:$0xff]
    %v266 = vld [vmem:[#allocation5 + $0x598] sm:$0xff]
    %v267 = vld [vmem:[#allocation5 + $0x5a0] sm:$0xff]
    %v268 = vld [vmem:[#allocation5 + $0x5a8] sm:$0xff]
    %v269 = vld [vmem:[#allocation5 + $0x5b0] sm:$0xff]
    %v270 = vld [vmem:[#allocation5 + $0x5b8] sm:$0xff]
    %v271 = vld [vmem:[#allocation5 + $0x5c0] sm:$0xff]
    %v272 = vld [vmem:[#allocation5 + $0x5c8] sm:$0xff]
    %v273 = vld [vmem:[#allocation5 + $0x5d0] sm:$0xff]
    %v274 = vld [vmem:[#allocation5 + $0x5d8] sm:$0xff]
    %v275 = vld [vmem:[#allocation5 + $0x5e0] sm:$0xff]
    %v276 = vld [vmem:[#allocation5 + $0x5e8] sm:$0xff]
    %v277 = vld [vmem:[#allocation5 + $0x5f0] sm:$0xff]
    %v278 = vld [vmem:[#allocation5 + $0x5f8] sm:$0xff]
    %v279 = vld [vmem:[#allocation5 + $0x600] sm:$0xff]
    %v280 = vld [vmem:[#allocation5 + $0x608] sm:$0xff]
    %v281 = vld [vmem:[#allocation5 + $0x610] sm:$0xff]
    %v282 = vld [vmem:[#allocation5 + $0x618] sm:$0xff]
    %v283 = vld [vmem:[#allocation7] sm:$0xf]
    %v285 = vlaneseq
    %v286 = vshrl.u32 %v285, 7
    %v287 = vsub.s32 0, %v286
    %v288 = vrot.slane %v283, %v287
    %v289 = vlaneseq
    %v290 = vshrl.u32 %v289, 7
    %v291 = vsub.s32 1, %v290
    %v292 = vrot.slane %v283, %v291
    %v293 = vlaneseq
    %v294 = vshrl.u32 %v293, 7
    %v295 = vsub.s32 2, %v294
    %v296 = vrot.slane %v283, %v295
    %v297 = vlaneseq
    %v298 = vshrl.u32 %v297, 7
    %v299 = vsub.s32 3, %v298
    %v300 = vrot.slane %v283, %v299
    %v501 = vunpack.c.l.b16 %v87
    %v502 = vunpack.c.h.b16 %v87
    %v503 = vunpack.c.l.b16 %v88
    %v504 = vunpack.c.h.b16 %v88
    %v505 = vunpack.c.l.b16 %v89
    %v506 = vunpack.c.h.b16 %v89
    %v507 = vunpack.c.l.b16 %v90
    %v508 = vunpack.c.h.b16 %v90
    %v509 = vunpack.c.l.b16 %v91
    %v510 = vunpack.c.h.b16 %v91
    %v511 = vunpack.c.l.b16 %v92
    %v512 = vunpack.c.h.b16 %v92
    %v513 = vunpack.c.l.b16 %v93
    %v514 = vunpack.c.h.b16 %v93
    %v515 = vunpack.c.l.b16 %v94
    %v516 = vunpack.c.h.b16 %v94
    %v517 = vunpack.c.l.b16 %v95
    %v518 = vunpack.c.h.b16 %v95
    %v519 = vunpack.c.l.b16 %v96
    %v520 = vunpack.c.h.b16 %v96
    %v521 = vunpack.c.l.b16 %v97
    %v522 = vunpack.c.h.b16 %v97
    %v523 = vunpack.c.l.b16 %v98
    %v524 = vunpack.c.h.b16 %v98
    %v525 = vunpack.c.l.b16 %v99
    %v526 = vunpack.c.h.b16 %v99
    %v527 = vunpack.c.l.b16 %v100
    %v528 = vunpack.c.h.b16 %v100
    %v529 = vunpack.c.l.b16 %v101
    %v530 = vunpack.c.h.b16 %v101
    %v531 = vunpack.c.l.b16 %v102
    %v532 = vunpack.c.h.b16 %v102
    %v533 = vunpack.c.l.b16 %v103
    %v534 = vunpack.c.h.b16 %v103
    %v535 = vunpack.c.l.b16 %v104
    %v536 = vunpack.c.h.b16 %v104
    %v537 = vunpack.c.l.b16 %v105
    %v538 = vunpack.c.h.b16 %v105
    %v539 = vunpack.c.l.b16 %v106
    %v540 = vunpack.c.h.b16 %v106
    %v541 = vunpack.c.l.b16 %v107
    %v542 = vunpack.c.h.b16 %v107
    %v543 = vunpack.c.l.b16 %v108
    %v544 = vunpack.c.h.b16 %v108
    %v545 = vunpack.c.l.b16 %v109
    %v546 = vunpack.c.h.b16 %v109
    %v547 = vunpack.c.l.b16 %v110
    %v548 = vunpack.c.h.b16 %v110
    %v549 = vunpack.c.l.b16 %v111
    %v550 = vunpack.c.h.b16 %v111
    %v551 = vunpack.c.l.b16 %v112
    %v552 = vunpack.c.h.b16 %v112
    %v553 = vunpack.c.l.b16 %v113
    %v554 = vunpack.c.h.b16 %v113
    %v555 = vunpack.c.l.b16 %v114
    %v556 = vunpack.c.h.b16 %v114
    %v557 = vunpack.c.l.b16 %v115
    %v558 = vunpack.c.h.b16 %v115
    %v559 = vunpack.c.l.b16 %v116
    %v560 = vunpack.c.h.b16 %v116
    %v561 = vunpack.c.l.b16 %v117
    %v562 = vunpack.c.h.b16 %v117
    %v563 = vunpack.c.l.b16 %v118
    %v564 = vunpack.c.h.b16 %v118
    %v565 = vunpack.c.l.b16 %v119
    %v566 = vunpack.c.h.b16 %v119
    %v567 = vunpack.c.l.b16 %v120
    %v568 = vunpack.c.h.b16 %v120
    %v569 = vunpack.c.l.b16 %v121
    %v570 = vunpack.c.h.b16 %v121
    %v571 = vunpack.c.l.b16 %v122
    %v572 = vunpack.c.h.b16 %v122
    %v573 = vunpack.c.l.b16 %v123
    %v574 = vunpack.c.h.b16 %v123
    %v575 = vunpack.c.l.b16 %v124
    %v576 = vunpack.c.h.b16 %v124
    %v577 = vunpack.c.l.b16 %v125
    %v578 = vunpack.c.h.b16 %v125
    %v579 = vunpack.c.l.b16 %v126
    %v580 = vunpack.c.h.b16 %v126
    %v581 = vunpack.c.l.b16 %v127
    %v582 = vunpack.c.h.b16 %v127
    %v583 = vunpack.c.l.b16 %v128
    %v584 = vunpack.c.h.b16 %v128
    %v585 = vunpack.c.l.b16 %v129
    %v586 = vunpack.c.h.b16 %v129
    %v587 = vunpack.c.l.b16 %v130
    %v588 = vunpack.c.h.b16 %v130
    %v589 = vunpack.c.l.b16 %v131
    %v590 = vunpack.c.h.b16 %v131
    %v591 = vunpack.c.l.b16 %v132
    %v592 = vunpack.c.h.b16 %v132
    %v593 = vunpack.c.l.b16 %v133
    %v594 = vunpack.c.h.b16 %v133
    %v595 = vunpack.c.l.b16 %v134
    %v596 = vunpack.c.h.b16 %v134
    %v597 = vunpack.c.l.b16 %v135
    %v598 = vunpack.c.h.b16 %v135
    %v599 = vunpack.c.l.b16 %v136
    %v600 = vunpack.c.h.b16 %v136
    %v601 = vunpack.c.l.b16 %v137
    %v602 = vunpack.c.h.b16 %v137
    %v603 = vunpack.c.l.b16 %v138
    %v604 = vunpack.c.h.b16 %v138
    %v605 = vunpack.c.l.b16 %v139
    %v606 = vunpack.c.h.b16 %v139
    %v607 = vunpack.c.l.b16 %v140
    %v608 = vunpack.c.h.b16 %v140
    %v609 = vunpack.c.l.b16 %v141
    %v610 = vunpack.c.h.b16 %v141
    %v611 = vunpack.c.l.b16 %v142
    %v612 = vunpack.c.h.b16 %v142
    %v613 = vunpack.c.l.b16 %v143
    %v614 = vunpack.c.h.b16 %v143
    %v615 = vunpack.c.l.b16 %v144
    %v616 = vunpack.c.h.b16 %v144
    %v617 = vunpack.c.l.b16 %v145
    %v618 = vunpack.c.h.b16 %v145
    %v619 = vunpack.c.l.b16 %v146
    %v620 = vunpack.c.h.b16 %v146
    %v621 = vunpack.c.l.b16 %v147
    %v622 = vunpack.c.h.b16 %v147
    %v623 = vunpack.c.l.b16 %v148
    %v624 = vunpack.c.h.b16 %v148
    %v625 = vunpack.c.l.b16 %v149
    %v626 = vunpack.c.h.b16 %v149
    %v627 = vunpack.c.l.b16 %v150
    %v628 = vunpack.c.h.b16 %v150
    %v629 = vunpack.c.l.b16 %v151
    %v630 = vunpack.c.h.b16 %v151
    %v631 = vunpack.c.l.b16 %v152
    %v632 = vunpack.c.h.b16 %v152
    %v633 = vunpack.c.l.b16 %v153
    %v634 = vunpack.c.h.b16 %v153
    %v635 = vunpack.c.l.b16 %v154
    %v636 = vunpack.c.h.b16 %v154
    %v637 = vunpack.c.l.b16 %v155
    %v638 = vunpack.c.h.b16 %v155
    %v639 = vunpack.c.l.b16 %v156
    %v640 = vunpack.c.h.b16 %v156
    %v641 = vunpack.c.l.b16 %v157
    %v642 = vunpack.c.h.b16 %v157
    %v643 = vunpack.c.l.b16 %v158
    %v644 = vunpack.c.h.b16 %v158
    %v645 = vunpack.c.l.b16 %v159
    %v646 = vunpack.c.h.b16 %v159
    %v647 = vunpack.c.l.b16 %v160
    %v648 = vunpack.c.h.b16 %v160
    %v649 = vunpack.c.l.b16 %v161
    %v650 = vunpack.c.h.b16 %v161
    %v651 = vunpack.c.l.b16 %v162
    %v652 = vunpack.c.h.b16 %v162
    %v653 = vunpack.c.l.b16 %v163
    %v654 = vunpack.c.h.b16 %v163
    %v655 = vunpack.c.l.b16 %v164
    %v656 = vunpack.c.h.b16 %v164
    %v657 = vunpack.c.l.b16 %v165
    %v658 = vunpack.c.h.b16 %v165
    %v659 = vunpack.c.l.b16 %v166
    %v660 = vunpack.c.h.b16 %v166
    %v661 = vunpack.c.l.b16 %v167
    %v662 = vunpack.c.h.b16 %v167
    %v663 = vunpack.c.l.b16 %v168
    %v664 = vunpack.c.h.b16 %v168
    %v665 = vunpack.c.l.b16 %v169
    %v666 = vunpack.c.h.b16 %v169
    %v667 = vunpack.c.l.b16 %v170
    %v668 = vunpack.c.h.b16 %v170
    %v669 = vunpack.c.l.b16 %v171
    %v670 = vunpack.c.h.b16 %v171
    %v671 = vunpack.c.l.b16 %v172
    %v672 = vunpack.c.h.b16 %v172
    %v673 = vunpack.c.l.b16 %v173
    %v674 = vunpack.c.h.b16 %v173
    %v675 = vunpack.c.l.b16 %v174
    %v676 = vunpack.c.h.b16 %v174
    %v677 = vunpack.c.l.b16 %v175
    %v678 = vunpack.c.h.b16 %v175
    %v679 = vunpack.c.l.b16 %v176
    %v680 = vunpack.c.h.b16 %v176
    %v681 = vunpack.c.l.b16 %v177
    %v682 = vunpack.c.h.b16 %v177
    %v683 = vunpack.c.l.b16 %v178
    %v684 = vunpack.c.h.b16 %v178
    %v685 = vunpack.c.l.b16 %v179
    %v686 = vunpack.c.h.b16 %v179
    %v687 = vunpack.c.l.b16 %v180
    %v688 = vunpack.c.h.b16 %v180
    %v689 = vunpack.c.l.b16 %v181
    %v690 = vunpack.c.h.b16 %v181
    %v691 = vunpack.c.l.b16 %v182
    %v692 = vunpack.c.h.b16 %v182
    %v693 = vunpack.c.l.b16 %v183
    %v694 = vunpack.c.h.b16 %v183
    %v695 = vunpack.c.l.b16 %v184
    %v696 = vunpack.c.h.b16 %v184
    %v697 = vunpack.c.l.b16 %v185
    %v698 = vunpack.c.h.b16 %v185
    %v699 = vunpack.c.l.b16 %v186
    %v700 = vunpack.c.h.b16 %v186
    %v701 = vunpack.c.l.b16 %v187
    %v702 = vunpack.c.h.b16 %v187
    %v703 = vunpack.c.l.b16 %v188
    %v704 = vunpack.c.h.b16 %v188
    %v705 = vunpack.c.l.b16 %v189
    %v706 = vunpack.c.h.b16 %v189
    %v707 = vunpack.c.l.b16 %v190
    %v708 = vunpack.c.h.b16 %v190
    %v709 = vunpack.c.l.b16 %v191
    %v710 = vunpack.c.h.b16 %v191
    %v711 = vunpack.c.l.b16 %v192
    %v712 = vunpack.c.h.b16 %v192
    %v713 = vunpack.c.l.b16 %v193
    %v714 = vunpack.c.h.b16 %v193
    %v715 = vunpack.c.l.b16 %v194
    %v716 = vunpack.c.h.b16 %v194
    %v717 = vunpack.c.l.b16 %v195
    %v718 = vunpack.c.h.b16 %v195
    %v719 = vunpack.c.l.b16 %v196
    %v720 = vunpack.c.h.b16 %v196
    %v721 = vunpack.c.l.b16 %v197
    %v722 = vunpack.c.h.b16 %v197
    %v723 = vunpack.c.l.b16 %v198
    %v724 = vunpack.c.h.b16 %v198
    %v725 = vunpack.c.l.b16 %v199
    %v726 = vunpack.c.h.b16 %v199
    %v727 = vunpack.c.l.b16 %v200
    %v728 = vunpack.c.h.b16 %v200
    %v729 = vunpack.c.l.b16 %v201
    %v730 = vunpack.c.h.b16 %v201
    %v731 = vunpack.c.l.b16 %v202
    %v732 = vunpack.c.h.b16 %v202
    %v733 = vunpack.c.l.b16 %v203
    %v734 = vunpack.c.h.b16 %v203
    %v735 = vunpack.c.l.b16 %v204
    %v736 = vunpack.c.h.b16 %v204
    %v737 = vunpack.c.l.b16 %v205
    %v738 = vunpack.c.h.b16 %v205
    %v739 = vunpack.c.l.b16 %v206
    %v740 = vunpack.c.h.b16 %v206
    %v741 = vunpack.c.l.b16 %v207
    %v742 = vunpack.c.h.b16 %v207
    %v743 = vunpack.c.l.b16 %v208
    %v744 = vunpack.c.h.b16 %v208
    %v745 = vunpack.c.l.b16 %v209
    %v746 = vunpack.c.h.b16 %v209
    %v747 = vunpack.c.l.b16 %v210
    %v748 = vunpack.c.h.b16 %v210
    %v749 = vunpack.c.l.b16 %v211
    %v750 = vunpack.c.h.b16 %v211
    %v751 = vunpack.c.l.b16 %v212
    %v752 = vunpack.c.h.b16 %v212
    %v753 = vunpack.c.l.b16 %v213
    %v754 = vunpack.c.h.b16 %v213
    %v755 = vunpack.c.l.b16 %v214
    %v756 = vunpack.c.h.b16 %v214
    %v757 = vunpack.c.l.b16 %v215
    %v758 = vunpack.c.h.b16 %v215
    %v759 = vunpack.c.l.b16 %v216
    %v760 = vunpack.c.h.b16 %v216
    %v761 = vunpack.c.l.b16 %v217
    %v762 = vunpack.c.h.b16 %v217
    %v763 = vunpack.c.l.b16 %v218
    %v764 = vunpack.c.h.b16 %v218
    %v765 = vunpack.c.l.b16 %v219
    %v766 = vunpack.c.h.b16 %v219
    %v767 = vunpack.c.l.b16 %v220
    %v768 = vunpack.c.h.b16 %v220
    %v769 = vunpack.c.l.b16 %v221
    %v770 = vunpack.c.h.b16 %v221
    %v771 = vunpack.c.l.b16 %v222
    %v772 = vunpack.c.h.b16 %v222
    %v773 = vunpack.c.l.b16 %v223
    %v774 = vunpack.c.h.b16 %v223
    %v775 = vunpack.c.l.b16 %v224
    %v776 = vunpack.c.h.b16 %v224
    %v777 = vunpack.c.l.b16 %v225
    %v778 = vunpack.c.h.b16 %v225
    %v779 = vunpack.c.l.b16 %v226
    %v780 = vunpack.c.h.b16 %v226
    %v781 = vunpack.c.l.b16 %v227
    %v782 = vunpack.c.h.b16 %v227
    %v783 = vunpack.c.l.b16 %v228
    %v784 = vunpack.c.h.b16 %v228
    %v785 = vunpack.c.l.b16 %v229
    %v786 = vunpack.c.h.b16 %v229
    %v787 = vunpack.c.l.b16 %v230
    %v788 = vunpack.c.h.b16 %v230
    %v789 = vunpack.c.l.b16 %v231
    %v790 = vunpack.c.h.b16 %v231
    %v791 = vunpack.c.l.b16 %v232
    %v792 = vunpack.c.h.b16 %v232
    %v793 = vunpack.c.l.b16 %v233
    %v794 = vunpack.c.h.b16 %v233
    %v795 = vunpack.c.l.b16 %v234
    %v796 = vunpack.c.h.b16 %v234
    %v797 = vunpack.c.l.b16 %v235
    %v798 = vunpack.c.h.b16 %v235
    %v799 = vunpack.c.l.b16 %v236
    %v800 = vunpack.c.h.b16 %v236
    %v801 = vunpack.c.l.b16 %v237
    %v802 = vunpack.c.h.b16 %v237
    %v803 = vunpack.c.l.b16 %v238
    %v804 = vunpack.c.h.b16 %v238
    %v805 = vunpack.c.l.b16 %v239
    %v806 = vunpack.c.h.b16 %v239
    %v807 = vunpack.c.l.b16 %v240
    %v808 = vunpack.c.h.b16 %v240
    %v809 = vunpack.c.l.b16 %v241
    %v810 = vunpack.c.h.b16 %v241
    %v811 = vunpack.c.l.b16 %v242
    %v812 = vunpack.c.h.b16 %v242
    %v813 = vunpack.c.l.b16 %v243
    %v814 = vunpack.c.h.b16 %v243
    %v815 = vunpack.c.l.b16 %v244
    %v816 = vunpack.c.h.b16 %v244
    %v817 = vunpack.c.l.b16 %v245
    %v818 = vunpack.c.h.b16 %v245
    %v819 = vunpack.c.l.b16 %v246
    %v820 = vunpack.c.h.b16 %v246
    %v821 = vunpack.c.l.b16 %v247
    %v822 = vunpack.c.h.b16 %v247
    %v823 = vunpack.c.l.b16 %v248
    %v824 = vunpack.c.h.b16 %v248
    %v825 = vunpack.c.l.b16 %v249
    %v826 = vunpack.c.h.b16 %v249
    %v827 = vunpack.c.l.b16 %v250
    %v828 = vunpack.c.h.b16 %v250
    %v829 = vunpack.c.l.b16 %v251
    %v830 = vunpack.c.h.b16 %v251
    %v831 = vunpack.c.l.b16 %v252
    %v832 = vunpack.c.h.b16 %v252
    %v833 = vunpack.c.l.b16 %v253
    %v834 = vunpack.c.h.b16 %v253
    %v835 = vunpack.c.l.b16 %v254
    %v836 = vunpack.c.h.b16 %v254
    %v837 = vunpack.c.l.b16 %v255
    %v838 = vunpack.c.h.b16 %v255
    %v839 = vunpack.c.l.b16 %v256
    %v840 = vunpack.c.h.b16 %v256
    %v841 = vunpack.c.l.b16 %v257
    %v842 = vunpack.c.h.b16 %v257
    %v843 = vunpack.c.l.b16 %v258
    %v844 = vunpack.c.h.b16 %v258
    %v845 = vunpack.c.l.b16 %v259
    %v846 = vunpack.c.h.b16 %v259
    %v847 = vunpack.c.l.b16 %v260
    %v848 = vunpack.c.h.b16 %v260
    %v849 = vunpack.c.l.b16 %v261
    %v850 = vunpack.c.h.b16 %v261
    %v851 = vunpack.c.l.b16 %v262
    %v852 = vunpack.c.h.b16 %v262
    %v853 = vunpack.c.l.b16 %v263
    %v854 = vunpack.c.h.b16 %v263
    %v855 = vunpack.c.l.b16 %v264
    %v856 = vunpack.c.h.b16 %v264
    %v857 = vunpack.c.l.b16 %v265
    %v858 = vunpack.c.h.b16 %v265
    %v859 = vunpack.c.l.b16 %v266
    %v860 = vunpack.c.h.b16 %v266
    %v861 = vunpack.c.l.b16 %v267
    %v862 = vunpack.c.h.b16 %v267
    %v863 = vunpack.c.l.b16 %v268
    %v864 = vunpack.c.h.b16 %v268
    %v865 = vunpack.c.l.b16 %v269
    %v866 = vunpack.c.h.b16 %v269
    %v867 = vunpack.c.l.b16 %v270
    %v868 = vunpack.c.h.b16 %v270
    %v869 = vunpack.c.l.b16 %v271
    %v870 = vunpack.c.h.b16 %v271
    %v871 = vunpack.c.l.b16 %v272
    %v872 = vunpack.c.h.b16 %v272
    %v873 = vunpack.c.l.b16 %v273
    %v874 = vunpack.c.h.b16 %v273
    %v875 = vunpack.c.l.b16 %v274
    %v876 = vunpack.c.h.b16 %v274
    %v877 = vunpack.c.l.b16 %v275
    %v878 = vunpack.c.h.b16 %v275
    %v879 = vunpack.c.l.b16 %v276
    %v880 = vunpack.c.h.b16 %v276
    %v881 = vunpack.c.l.b16 %v277
    %v882 = vunpack.c.h.b16 %v277
    %v883 = vunpack.c.l.b16 %v278
    %v884 = vunpack.c.h.b16 %v278
    %v885 = vunpack.c.l.b16 %v279
    %v886 = vunpack.c.h.b16 %v279
    %v887 = vunpack.c.l.b16 %v280
    %v888 = vunpack.c.h.b16 %v280
    %v889 = vunpack.c.l.b16 %v281
    %v890 = vunpack.c.h.b16 %v281
    %v891 = vunpack.c.l.b16 %v282
    %v892 = vunpack.c.h.b16 %v282
    %v893 = vpack.c.b16 %v505, %v501
    %v894 = vpack.c.b16 %v506, %v502
    %v895 = vpack.c.b16 %v507, %v503
    %v896 = vpack.c.b16 %v508, %v504
    %v897 = vpack.c.b16 %v513, %v509
    %v898 = vpack.c.b16 %v514, %v510
    %v899 = vpack.c.b16 %v515, %v511
    %v900 = vpack.c.b16 %v516, %v512
    %v901 = vpack.c.b16 %v521, %v517
    %v902 = vpack.c.b16 %v522, %v518
    %v903 = vpack.c.b16 %v523, %v519
    %v904 = vpack.c.b16 %v524, %v520
    %v905 = vpack.c.b16 %v529, %v525
    %v906 = vpack.c.b16 %v530, %v526
    %v907 = vpack.c.b16 %v531, %v527
    %v908 = vpack.c.b16 %v532, %v528
    %v909 = vpack.c.b16 %v537, %v533
    %v910 = vpack.c.b16 %v538, %v534
    %v911 = vpack.c.b16 %v539, %v535
    %v912 = vpack.c.b16 %v540, %v536
    %v913 = vpack.c.b16 %v545, %v541
    %v914 = vpack.c.b16 %v546, %v542
    %v915 = vpack.c.b16 %v547, %v543
    %v916 = vpack.c.b16 %v548, %v544
    %v917 = vpack.c.b16 %v553, %v549
    %v918 = vpack.c.b16 %v554, %v550
    %v919 = vpack.c.b16 %v555, %v551
    %v920 = vpack.c.b16 %v556, %v552
    %v921 = vpack.c.b16 %v561, %v557
    %v922 = vpack.c.b16 %v562, %v558
    %v923 = vpack.c.b16 %v563, %v559
    %v924 = vpack.c.b16 %v564, %v560
    %v925 = vpack.c.b16 %v569, %v565
    %v926 = vpack.c.b16 %v570, %v566
    %v927 = vpack.c.b16 %v571, %v567
    %v928 = vpack.c.b16 %v572, %v568
    %v929 = vpack.c.b16 %v577, %v573
    %v930 = vpack.c.b16 %v578, %v574
    %v931 = vpack.c.b16 %v579, %v575
    %v932 = vpack.c.b16 %v580, %v576
    %v933 = vpack.c.b16 %v585, %v581
    %v934 = vpack.c.b16 %v586, %v582
    %v935 = vpack.c.b16 %v587, %v583
    %v936 = vpack.c.b16 %v588, %v584
    %v937 = vpack.c.b16 %v593, %v589
    %v938 = vpack.c.b16 %v594, %v590
    %v939 = vpack.c.b16 %v595, %v591
    %v940 = vpack.c.b16 %v596, %v592
    %v941 = vpack.c.b16 %v601, %v597
    %v942 = vpack.c.b16 %v602, %v598
    %v943 = vpack.c.b16 %v603, %v599
    %v944 = vpack.c.b16 %v604, %v600
    %v945 = vpack.c.b16 %v609, %v605
    %v946 = vpack.c.b16 %v610, %v606
    %v947 = vpack.c.b16 %v611, %v607
    %v948 = vpack.c.b16 %v612, %v608
    %v949 = vpack.c.b16 %v617, %v613
    %v950 = vpack.c.b16 %v618, %v614
    %v951 = vpack.c.b16 %v619, %v615
    %v952 = vpack.c.b16 %v620, %v616
    %v953 = vpack.c.b16 %v625, %v621
    %v954 = vpack.c.b16 %v626, %v622
    %v955 = vpack.c.b16 %v627, %v623
    %v956 = vpack.c.b16 %v628, %v624
    %v957 = vpack.c.b16 %v633, %v629
    %v958 = vpack.c.b16 %v634, %v630
    %v959 = vpack.c.b16 %v635, %v631
    %v960 = vpack.c.b16 %v636, %v632
    %v961 = vpack.c.b16 %v641, %v637
    %v962 = vpack.c.b16 %v642, %v638
    %v963 = vpack.c.b16 %v643, %v639
    %v964 = vpack.c.b16 %v644, %v640
    %v965 = vpack.c.b16 %v649, %v645
    %v966 = vpack.c.b16 %v650, %v646
    %v967 = vpack.c.b16 %v651, %v647
    %v968 = vpack.c.b16 %v652, %v648
    %v969 = vpack.c.b16 %v657, %v653
    %v970 = vpack.c.b16 %v658, %v654
    %v971 = vpack.c.b16 %v659, %v655
    %v972 = vpack.c.b16 %v660, %v656
    %v973 = vpack.c.b16 %v665, %v661
    %v974 = vpack.c.b16 %v666, %v662
    %v975 = vpack.c.b16 %v667, %v663
    %v976 = vpack.c.b16 %v668, %v664
    %v977 = vpack.c.b16 %v673, %v669
    %v978 = vpack.c.b16 %v674, %v670
    %v979 = vpack.c.b16 %v675, %v671
    %v980 = vpack.c.b16 %v676, %v672
    %v981 = vpack.c.b16 %v681, %v677
    %v982 = vpack.c.b16 %v682, %v678
    %v983 = vpack.c.b16 %v683, %v679
    %v984 = vpack.c.b16 %v684, %v680
    %v985 = vpack.c.b16 %v689, %v685
    %v986 = vpack.c.b16 %v690, %v686
    %v987 = vpack.c.b16 %v691, %v687
    %v988 = vpack.c.b16 %v692, %v688
    %v989 = vpack.c.b16 %v697, %v693
    %v990 = vpack.c.b16 %v698, %v694
    %v991 = vpack.c.b16 %v699, %v695
    %v992 = vpack.c.b16 %v700, %v696
    %v993 = vpack.c.b16 %v705, %v701
    %v994 = vpack.c.b16 %v706, %v702
    %v995 = vpack.c.b16 %v707, %v703
    %v996 = vpack.c.b16 %v708, %v704
    %v997 = vpack.c.b16 %v713, %v709
    %v998 = vpack.c.b16 %v714, %v710
    %v999 = vpack.c.b16 %v715, %v711
    %v1000 = vpack.c.b16 %v716, %v712
    %v1001 = vpack.c.b16 %v721, %v717
    %v1002 = vpack.c.b16 %v722, %v718
    %v1003 = vpack.c.b16 %v723, %v719
    %v1004 = vpack.c.b16 %v724, %v720
    %v1005 = vpack.c.b16 %v729, %v725
    %v1006 = vpack.c.b16 %v730, %v726
    %v1007 = vpack.c.b16 %v731, %v727
    %v1008 = vpack.c.b16 %v732, %v728
    %v1009 = vpack.c.b16 %v737, %v733
    %v1010 = vpack.c.b16 %v738, %v734
    %v1011 = vpack.c.b16 %v739, %v735
    %v1012 = vpack.c.b16 %v740, %v736
    %v1013 = vpack.c.b16 %v745, %v741
    %v1014 = vpack.c.b16 %v746, %v742
    %v1015 = vpack.c.b16 %v747, %v743
    %v1016 = vpack.c.b16 %v748, %v744
    %v1017 = vpack.c.b16 %v753, %v749
    %v1018 = vpack.c.b16 %v754, %v750
    %v1019 = vpack.c.b16 %v755, %v751
    %v1020 = vpack.c.b16 %v756, %v752
    %v1021 = vpack.c.b16 %v761, %v757
    %v1022 = vpack.c.b16 %v762, %v758
    %v1023 = vpack.c.b16 %v763, %v759
    %v1024 = vpack.c.b16 %v764, %v760
    %v1025 = vpack.c.b16 %v769, %v765
    %v1026 = vpack.c.b16 %v770, %v766
    %v1027 = vpack.c.b16 %v771, %v767
    %v1028 = vpack.c.b16 %v772, %v768
    %v1029 = vpack.c.b16 %v777, %v773
    %v1030 = vpack.c.b16 %v778, %v774
    %v1031 = vpack.c.b16 %v779, %v775
    %v1032 = vpack.c.b16 %v780, %v776
    %v1033 = vpack.c.b16 %v785, %v781
    %v1034 = vpack.c.b16 %v786, %v782
    %v1035 = vpack.c.b16 %v787, %v783
    %v1036 = vpack.c.b16 %v788, %v784
    %v1037 = vpack.c.b16 %v793, %v789
    %v1038 = vpack.c.b16 %v794, %v790
    %v1039 = vpack.c.b16 %v795, %v791
    %v1040 = vpack.c.b16 %v796, %v792
    %v1041 = vpack.c.b16 %v801, %v797
    %v1042 = vpack.c.b16 %v802, %v798
    %v1043 = vpack.c.b16 %v803, %v799
    %v1044 = vpack.c.b16 %v804, %v800
    %v1045 = vpack.c.b16 %v809, %v805
    %v1046 = vpack.c.b16 %v810, %v806
    %v1047 = vpack.c.b16 %v811, %v807
    %v1048 = vpack.c.b16 %v812, %v808
    %v1049 = vpack.c.b16 %v817, %v813
    %v1050 = vpack.c.b16 %v818, %v814
    %v1051 = vpack.c.b16 %v819, %v815
    %v1052 = vpack.c.b16 %v820, %v816
    %v1053 = vpack.c.b16 %v825, %v821
    %v1054 = vpack.c.b16 %v826, %v822
    %v1055 = vpack.c.b16 %v827, %v823
    %v1056 = vpack.c.b16 %v828, %v824
    %v1057 = vpack.c.b16 %v833, %v829
    %v1058 = vpack.c.b16 %v834, %v830
    %v1059 = vpack.c.b16 %v835, %v831
    %v1060 = vpack.c.b16 %v836, %v832
    %v1061 = vpack.c.b16 %v841, %v837
    %v1062 = vpack.c.b16 %v842, %v838
    %v1063 = vpack.c.b16 %v843, %v839
    %v1064 = vpack.c.b16 %v844, %v840
    %v1065 = vpack.c.b16 %v849, %v845
    %v1066 = vpack.c.b16 %v850, %v846
    %v1067 = vpack.c.b16 %v851, %v847
    %v1068 = vpack.c.b16 %v852, %v848
    %v1069 = vpack.c.b16 %v857, %v853
    %v1070 = vpack.c.b16 %v858, %v854
    %v1071 = vpack.c.b16 %v859, %v855
    %v1072 = vpack.c.b16 %v860, %v856
    %v1073 = vpack.c.b16 %v865, %v861
    %v1074 = vpack.c.b16 %v866, %v862
    %v1075 = vpack.c.b16 %v867, %v863
    %v1076 = vpack.c.b16 %v868, %v864
    %v1077 = vpack.c.b16 %v873, %v869
    %v1078 = vpack.c.b16 %v874, %v870
    %v1079 = vpack.c.b16 %v875, %v871
    %v1080 = vpack.c.b16 %v876, %v872
    %v1081 = vpack.c.b16 %v881, %v877
    %v1082 = vpack.c.b16 %v882, %v878
    %v1083 = vpack.c.b16 %v883, %v879
    %v1084 = vpack.c.b16 %v884, %v880
    %v1085 = vpack.c.b16 %v889, %v885
    %v1086 = vpack.c.b16 %v890, %v886
    %v1087 = vpack.c.b16 %v891, %v887
    %v1088 = vpack.c.b16 %v892, %v888
    %vm1285 = vcmask 130048
    %v1287 = vsel %vm1285, %v86, 0
    %1289 = vmatprep.subr.bf16.mxu0 %v922
    %1290 = vmatpush1.bf16.msra.mxu0 %v921
    %1291 = vmatprep.subr.bf16.mxu0 %v918
    %1292 = vmatpush1.bf16.msra.mxu0 %v917
    %1293 = vmatprep.subr.bf16.mxu0 %v914
    %1294 = vmatpush1.bf16.msra.mxu0 %v913
    %1295 = vmatprep.subr.bf16.mxu0 %v910
    %1296 = vmatpush1.bf16.msra.mxu0 %v909
    %1297 = vmatprep.subr.bf16.mxu0 %v906
    %1298 = vmatpush1.bf16.msra.mxu0 %v905
    %1299 = vmatprep.subr.bf16.mxu0 %v902
    %1300 = vmatpush1.bf16.msra.mxu0 %v901
    %1301 = vmatprep.subr.bf16.mxu0 %v898
    %1302 = vmatpush1.bf16.msra.mxu0 %v897
    %1303 = vmatprep.subr.bf16.mxu0 %v894
    %1304 = vmatpush1.bf16.msra.mxu0 %v893
    %1305 = vmatprep.subr.bf16.mxu0 %v954
    %1306 = vmatpush2.bf16.msra.mxu0 %v953
    %1307 = vmatprep.subr.bf16.mxu0 %v950
    %1308 = vmatpush2.bf16.msra.mxu0 %v949
    %1309 = vmatprep.subr.bf16.mxu0 %v946
    %1310 = vmatpush2.bf16.msra.mxu0 %v945
    %1311 = vmatprep.subr.bf16.mxu0 %v942
    %1312 = vmatpush2.bf16.msra.mxu0 %v941
    %1313 = vmatprep.subr.bf16.mxu0 %v938
    %1314 = vmatpush2.bf16.msra.mxu0 %v937
    %1315 = vmatprep.subr.bf16.mxu0 %v934
    %1316 = vmatpush2.bf16.msra.mxu0 %v933
    %1317 = vmatprep.subr.bf16.mxu0 %v930
    %1318 = vmatpush2.bf16.msra.mxu0 %v929
    %1319 = vmatprep.subr.bf16.mxu0 %v926
    %1320 = vmatpush2.bf16.msra.mxu0 %v925
    %1321 = vmatprep.mubr.bf16.mxu0 %v81
    %1322 = vmatmul.mubr.bf16.gmra.mxu0 %v80
    %v1323 = vpop.f32.mrf.mxu0
    %v1324 = vadd.f32 %v288, %v1323
    %v1325 = vpop.f32.mrf.mxu0
    %v1326 = vadd.f32 %v292, %v1325
    %v1327 = vpop.f32.mrf.mxu0
    %v1328 = vpop.f32.mrf.mxu0
    %1329 = vdwg.mxu0
    %1330 = vmatprep.subr.bf16.mxu0 %v986
    %1331 = vmatpush1.bf16.msra.mxu0 %v985
    %1332 = vmatprep.subr.bf16.mxu0 %v982
    %1333 = vmatpush1.bf16.msra.mxu0 %v981
    %1334 = vmatprep.subr.bf16.mxu0 %v978
    %1335 = vmatpush1.bf16.msra.mxu0 %v977
    %1336 = vmatprep.subr.bf16.mxu0 %v974
    %1337 = vmatpush1.bf16.msra.mxu0 %v973
    %1338 = vmatprep.subr.bf16.mxu0 %v970
    %1339 = vmatpush1.bf16.msra.mxu0 %v969
    %1340 = vmatprep.subr.bf16.mxu0 %v966
    %1341 = vmatpush1.bf16.msra.mxu0 %v965
    %1342 = vmatprep.subr.bf16.mxu0 %v962
    %1343 = vmatpush1.bf16.msra.mxu0 %v961
    %1344 = vmatprep.subr.bf16.mxu0 %v958
    %1345 = vmatpush1.bf16.msra.mxu0 %v957
    %1346 = vmatprep.subr.bf16.mxu0 %v1018
    %1347 = vmatpush2.bf16.msra.mxu0 %v1017
    %1348 = vmatprep.subr.bf16.mxu0 %v1014
    %1349 = vmatpush2.bf16.msra.mxu0 %v1013
    %1350 = vmatprep.subr.bf16.mxu0 %v1010
    %1351 = vmatpush2.bf16.msra.mxu0 %v1009
    %1352 = vmatprep.subr.bf16.mxu0 %v1006
    %1353 = vmatpush2.bf16.msra.mxu0 %v1005
    %1354 = vmatprep.subr.bf16.mxu0 %v1002
    %1355 = vmatpush2.bf16.msra.mxu0 %v1001
    %1356 = vmatprep.subr.bf16.mxu0 %v998
    %1357 = vmatpush2.bf16.msra.mxu0 %v997
    %1358 = vmatprep.subr.bf16.mxu0 %v994
    %1359 = vmatpush2.bf16.msra.mxu0 %v993
    %1360 = vmatprep.subr.bf16.mxu0 %v990
    %1361 = vmatpush2.bf16.msra.mxu0 %v989
    %1362 = vmatprep.mubr.bf16.mxu0 %v83
    %1363 = vmatmul.mubr.bf16.gmra.mxu0 %v82
    %v1364 = vpop.f32.mrf.mxu0
    %v1365 = vadd.f32 %v1324, %v1364
    %v1366 = vpop.f32.mrf.mxu0
    %v1367 = vadd.f32 %v1326, %v1366
    %v1368 = vpop.f32.mrf.mxu0
    %v1369 = vpop.f32.mrf.mxu0
    %1370 = vdwg.mxu0
    %1371 = vmatprep.subr.bf16.mxu0 %v1050
    %1372 = vmatpush1.bf16.msra.mxu0 %v1049
    %1373 = vmatprep.subr.bf16.mxu0 %v1046
    %1374 = vmatpush1.bf16.msra.mxu0 %v1045
    %1375 = vmatprep.subr.bf16.mxu0 %v1042
    %1376 = vmatpush1.bf16.msra.mxu0 %v1041
    %1377 = vmatprep.subr.bf16.mxu0 %v1038
    %1378 = vmatpush1.bf16.msra.mxu0 %v1037
    %1379 = vmatprep.subr.bf16.mxu0 %v1034
    %1380 = vmatpush1.bf16.msra.mxu0 %v1033
    %1381 = vmatprep.subr.bf16.mxu0 %v1030
    %1382 = vmatpush1.bf16.msra.mxu0 %v1029
    %1383 = vmatprep.subr.bf16.mxu0 %v1026
    %1384 = vmatpush1.bf16.msra.mxu0 %v1025
    %1385 = vmatprep.subr.bf16.mxu0 %v1022
    %1386 = vmatpush1.bf16.msra.mxu0 %v1021
    %1387 = vmatprep.subr.bf16.mxu0 %v1082
    %1388 = vmatpush2.bf16.msra.mxu0 %v1081
    %1389 = vmatprep.subr.bf16.mxu0 %v1078
    %1390 = vmatpush2.bf16.msra.mxu0 %v1077
    %1391 = vmatprep.subr.bf16.mxu0 %v1074
    %1392 = vmatpush2.bf16.msra.mxu0 %v1073
    %1393 = vmatprep.subr.bf16.mxu0 %v1070
    %1394 = vmatpush2.bf16.msra.mxu0 %v1069
    %1395 = vmatprep.subr.bf16.mxu0 %v1066
    %1396 = vmatpush2.bf16.msra.mxu0 %v1065
    %1397 = vmatprep.subr.bf16.mxu0 %v1062
    %1398 = vmatpush2.bf16.msra.mxu0 %v1061
    %1399 = vmatprep.subr.bf16.mxu0 %v1058
    %1400 = vmatpush2.bf16.msra.mxu0 %v1057
    %1401 = vmatprep.subr.bf16.mxu0 %v1054
    %1402 = vmatpush2.bf16.msra.mxu0 %v1053
    %1403 = vmatprep.mubr.bf16.mxu0 %v85
    %1404 = vmatmul.mubr.bf16.gmra.mxu0 %v84
    %v1405 = vpop.f32.mrf.mxu0
    %v1406 = vadd.f32 %v1365, %v1405
    %v1407 = vpop.f32.mrf.mxu0
    %v1408 = vadd.f32 %v1367, %v1407
    %v1409 = vpop.f32.mrf.mxu0
    %v1410 = vpop.f32.mrf.mxu0
    %1411 = vdwg.mxu0
    %1412 = vmatprep.subr.bf16.mxu0 0
    %1413 = vmatpush1.bf16.msra.mxu0 0
    %1414 = vmatprep.subr.bf16.mxu0 0
    %1415 = vmatpush1.bf16.msra.mxu0 0
    %1416 = vmatprep.subr.bf16.mxu0 0
    %1417 = vmatpush1.bf16.msra.mxu0 0
    %1418 = vmatprep.subr.bf16.mxu0 0
    %1419 = vmatpush1.bf16.msra.mxu0 0
    %1420 = vmatprep.subr.bf16.mxu0 0
    %1421 = vmatpush1.bf16.msra.mxu0 0
    %1422 = vmatprep.subr.bf16.mxu0 0
    %1423 = vmatpush1.bf16.msra.mxu0 0
    %1424 = vmatprep.subr.bf16.mxu0 0
    %1425 = vmatpush1.bf16.msra.mxu0 0
    %1426 = vmatprep.subr.bf16.mxu0 %v1086
    %1427 = vmatpush1.bf16.msra.mxu0 %v1085
    %1428 = vmatprep.subr.bf16.mxu0 0
    %1429 = vmatpush2.bf16.msra.mxu0 0
    %1430 = vmatprep.subr.bf16.mxu0 0
    %1431 = vmatpush2.bf16.msra.mxu0 0
    %1432 = vmatprep.subr.bf16.mxu0 0
    %1433 = vmatpush2.bf16.msra.mxu0 0
    %1434 = vmatprep.subr.bf16.mxu0 0
    %1435 = vmatpush2.bf16.msra.mxu0 0
    %1436 = vmatprep.subr.bf16.mxu0 0
    %1437 = vmatpush2.bf16.msra.mxu0 0
    %1438 = vmatprep.subr.bf16.mxu0 0
    %1439 = vmatpush2.bf16.msra.mxu0 0
    %1440 = vmatprep.subr.bf16.mxu0 0
    %1441 = vmatpush2.bf16.msra.mxu0 0
    %1442 = vmatprep.subr.bf16.mxu0 0
    %1443 = vmatpush2.bf16.msra.mxu0 0
    %1444 = vmatprep.mubr.bf16.mxu0 0
    %1445 = vmatmul.mubr.bf16.gmra.mxu0 %v1287
    %v1446 = vpop.f32.mrf.mxu0
    %v1447 = vadd.f32 %v1406, %v1446
    %v1448 = vpop.f32.mrf.mxu0
    %v1449 = vadd.f32 %v1408, %v1448
    %v1450 = vpop.f32.mrf.mxu0
    %v1451 = vpop.f32.mrf.mxu0
    %1452 = vdwg.mxu0
    %1453 = vmatprep.subr.bf16.mxu0 %v924
    %1454 = vmatpush1.bf16.msra.mxu0 %v923
    %1455 = vmatprep.subr.bf16.mxu0 %v920
    %1456 = vmatpush1.bf16.msra.mxu0 %v919
    %1457 = vmatprep.subr.bf16.mxu0 %v916
    %1458 = vmatpush1.bf16.msra.mxu0 %v915
    %1459 = vmatprep.subr.bf16.mxu0 %v912
    %1460 = vmatpush1.bf16.msra.mxu0 %v911
    %1461 = vmatprep.subr.bf16.mxu0 %v908
    %1462 = vmatpush1.bf16.msra.mxu0 %v907
    %1463 = vmatprep.subr.bf16.mxu0 %v904
    %1464 = vmatpush1.bf16.msra.mxu0 %v903
    %1465 = vmatprep.subr.bf16.mxu0 %v900
    %1466 = vmatpush1.bf16.msra.mxu0 %v899
    %1467 = vmatprep.subr.bf16.mxu0 %v896
    %1468 = vmatpush1.bf16.msra.mxu0 %v895
    %1469 = vmatprep.subr.bf16.mxu0 %v956
    %1470 = vmatpush2.bf16.msra.mxu0 %v955
    %1471 = vmatprep.subr.bf16.mxu0 %v952
    %1472 = vmatpush2.bf16.msra.mxu0 %v951
    %1473 = vmatprep.subr.bf16.mxu0 %v948
    %1474 = vmatpush2.bf16.msra.mxu0 %v947
    %1475 = vmatprep.subr.bf16.mxu0 %v944
    %1476 = vmatpush2.bf16.msra.mxu0 %v943
    %1477 = vmatprep.subr.bf16.mxu0 %v940
    %1478 = vmatpush2.bf16.msra.mxu0 %v939
    %1479 = vmatprep.subr.bf16.mxu0 %v936
    %1480 = vmatpush2.bf16.msra.mxu0 %v935
    %1481 = vmatprep.subr.bf16.mxu0 %v932
    %1482 = vmatpush2.bf16.msra.mxu0 %v931
    %1483 = vmatprep.subr.bf16.mxu0 %v928
    %1484 = vmatpush2.bf16.msra.mxu0 %v927
    %1485 = vmatprep.mubr.bf16.mxu0 %v81
    %1486 = vmatmul.mubr.bf16.gmra.mxu0 %v80
    %v1487 = vpop.f32.mrf.mxu0
    %v1488 = vadd.f32 %v296, %v1487
    %v1489 = vpop.f32.mrf.mxu0
    %v1490 = vadd.f32 %v300, %v1489
    %v1491 = vpop.f32.mrf.mxu0
    %v1492 = vpop.f32.mrf.mxu0
    %1493 = vdwg.mxu0
    %1494 = vmatprep.subr.bf16.mxu0 %v988
    %1495 = vmatpush1.bf16.msra.mxu0 %v987
    %1496 = vmatprep.subr.bf16.mxu0 %v984
    %1497 = vmatpush1.bf16.msra.mxu0 %v983
    %1498 = vmatprep.subr.bf16.mxu0 %v980
    %1499 = vmatpush1.bf16.msra.mxu0 %v979
    %1500 = vmatprep.subr.bf16.mxu0 %v976
    %1501 = vmatpush1.bf16.msra.mxu0 %v975
    %1502 = vmatprep.subr.bf16.mxu0 %v972
    %1503 = vmatpush1.bf16.msra.mxu0 %v971
    %1504 = vmatprep.subr.bf16.mxu0 %v968
    %1505 = vmatpush1.bf16.msra.mxu0 %v967
    %1506 = vmatprep.subr.bf16.mxu0 %v964
    %1507 = vmatpush1.bf16.msra.mxu0 %v963
    %1508 = vmatprep.subr.bf16.mxu0 %v960
    %1509 = vmatpush1.bf16.msra.mxu0 %v959
    %1510 = vmatprep.subr.bf16.mxu0 %v1020
    %1511 = vmatpush2.bf16.msra.mxu0 %v1019
    %1512 = vmatprep.subr.bf16.mxu0 %v1016
    %1513 = vmatpush2.bf16.msra.mxu0 %v1015
    %1514 = vmatprep.subr.bf16.mxu0 %v1012
    %1515 = vmatpush2.bf16.msra.mxu0 %v1011
    %1516 = vmatprep.subr.bf16.mxu0 %v1008
    %1517 = vmatpush2.bf16.msra.mxu0 %v1007
    %1518 = vmatprep.subr.bf16.mxu0 %v1004
    %1519 = vmatpush2.bf16.msra.mxu0 %v1003
    %1520 = vmatprep.subr.bf16.mxu0 %v1000
    %1521 = vmatpush2.bf16.msra.mxu0 %v999
    %1522 = vmatprep.subr.bf16.mxu0 %v996
    %1523 = vmatpush2.bf16.msra.mxu0 %v995
    %1524 = vmatprep.subr.bf16.mxu0 %v992
    %1525 = vmatpush2.bf16.msra.mxu0 %v991
    %1526 = vmatprep.mubr.bf16.mxu0 %v83
    %1527 = vmatmul.mubr.bf16.gmra.mxu0 %v82
    %v1528 = vpop.f32.mrf.mxu0
    %v1529 = vadd.f32 %v1488, %v1528
    %v1530 = vpop.f32.mrf.mxu0
    %v1531 = vadd.f32 %v1490, %v1530
    %v1532 = vpop.f32.mrf.mxu0
    %v1533 = vpop.f32.mrf.mxu0
    %1534 = vdwg.mxu0
    %1535 = vmatprep.subr.bf16.mxu0 %v1052
    %1536 = vmatpush1.bf16.msra.mxu0 %v1051
    %1537 = vmatprep.subr.bf16.mxu0 %v1048
    %1538 = vmatpush1.bf16.msra.mxu0 %v1047
    %1539 = vmatprep.subr.bf16.mxu0 %v1044
    %1540 = vmatpush1.bf16.msra.mxu0 %v1043
    %1541 = vmatprep.subr.bf16.mxu0 %v1040
    %1542 = vmatpush1.bf16.msra.mxu0 %v1039
    %1543 = vmatprep.subr.bf16.mxu0 %v1036
    %1544 = vmatpush1.bf16.msra.mxu0 %v1035
    %1545 = vmatprep.subr.bf16.mxu0 %v1032
    %1546 = vmatpush1.bf16.msra.mxu0 %v1031
    %1547 = vmatprep.subr.bf16.mxu0 %v1028
    %1548 = vmatpush1.bf16.msra.mxu0 %v1027
    %1549 = vmatprep.subr.bf16.mxu0 %v1024
    %1550 = vmatpush1.bf16.msra.mxu0 %v1023
    %1551 = vmatprep.subr.bf16.mxu0 %v1084
    %1552 = vmatpush2.bf16.msra.mxu0 %v1083
    %1553 = vmatprep.subr.bf16.mxu0 %v1080
    %1554 = vmatpush2.bf16.msra.mxu0 %v1079
    %1555 = vmatprep.subr.bf16.mxu0 %v1076
    %1556 = vmatpush2.bf16.msra.mxu0 %v1075
    %1557 = vmatprep.subr.bf16.mxu0 %v1072
    %1558 = vmatpush2.bf16.msra.mxu0 %v1071
    %1559 = vmatprep.subr.bf16.mxu0 %v1068
    %1560 = vmatpush2.bf16.msra.mxu0 %v1067
    %1561 = vmatprep.subr.bf16.mxu0 %v1064
    %1562 = vmatpush2.bf16.msra.mxu0 %v1063
    %1563 = vmatprep.subr.bf16.mxu0 %v1060
    %1564 = vmatpush2.bf16.msra.mxu0 %v1059
    %1565 = vmatprep.subr.bf16.mxu0 %v1056
    %1566 = vmatpush2.bf16.msra.mxu0 %v1055
    %1567 = vmatprep.mubr.bf16.mxu0 %v85
    %1568 = vmatmul.mubr.bf16.gmra.mxu0 %v84
    %v1569 = vpop.f32.mrf.mxu0
    %v1570 = vadd.f32 %v1529, %v1569
    %v1571 = vpop.f32.mrf.mxu0
    %v1572 = vadd.f32 %v1531, %v1571
    %v1573 = vpop.f32.mrf.mxu0
    %v1574 = vpop.f32.mrf.mxu0
    %1575 = vdwg.mxu0
    %1576 = vmatprep.subr.bf16.mxu0 0
    %1577 = vmatpush1.bf16.msra.mxu0 0
    %1578 = vmatprep.subr.bf16.mxu0 0
    %1579 = vmatpush1.bf16.msra.mxu0 0
    %1580 = vmatprep.subr.bf16.mxu0 0
    %1581 = vmatpush1.bf16.msra.mxu0 0
    %1582 = vmatprep.subr.bf16.mxu0 0
    %1583 = vmatpush1.bf16.msra.mxu0 0
    %1584 = vmatprep.subr.bf16.mxu0 0
    %1585 = vmatpush1.bf16.msra.mxu0 0
    %1586 = vmatprep.subr.bf16.mxu0 0
    %1587 = vmatpush1.bf16.msra.mxu0 0
    %1588 = vmatprep.subr.bf16.mxu0 0
    %1589 = vmatpush1.bf16.msra.mxu0 0
    %1590 = vmatprep.subr.bf16.mxu0 %v1088
    %1591 = vmatpush1.bf16.msra.mxu0 %v1087
    %1592 = vmatprep.subr.bf16.mxu0 0
    %1593 = vmatpush2.bf16.msra.mxu0 0
    %1594 = vmatprep.subr.bf16.mxu0 0
    %1595 = vmatpush2.bf16.msra.mxu0 0
    %1596 = vmatprep.subr.bf16.mxu0 0
    %1597 = vmatpush2.bf16.msra.mxu0 0
    %1598 = vmatprep.subr.bf16.mxu0 0
    %1599 = vmatpush2.bf16.msra.mxu0 0
    %1600 = vmatprep.subr.bf16.mxu0 0
    %1601 = vmatpush2.bf16.msra.mxu0 0
    %1602 = vmatprep.subr.bf16.mxu0 0
    %1603 = vmatpush2.bf16.msra.mxu0 0
    %1604 = vmatprep.subr.bf16.mxu0 0
    %1605 = vmatpush2.bf16.msra.mxu0 0
    %1606 = vmatprep.subr.bf16.mxu0 0
    %1607 = vmatpush2.bf16.msra.mxu0 0
    %1608 = vmatprep.mubr.bf16.mxu0 0
    %1609 = vmatmul.mubr.bf16.gmra.mxu0 %v1287
    %v1610 = vpop.f32.mrf.mxu0
    %v1611 = vadd.f32 %v1570, %v1610
    %v1612 = vpop.f32.mrf.mxu0
    %v1613 = vadd.f32 %v1572, %v1612
    %v1614 = vpop.f32.mrf.mxu0
    %v1615 = vpop.f32.mrf.mxu0
    %1616 = vdwg.mxu0
    %v1617 = vmax.f32 %v1447, 0.0
    %v1618 = vmax.f32 %v1449, 0.0
    %v1619 = vmax.f32 %v1611, 0.0
    %v1620 = vmax.f32 %v1613, 0.0
    %v1621 = vpack.c.bf16 %v1617, %v1617
    %v1622 = vpack.c.bf16 %v1618, %v1618
    %v1623 = vpack.c.bf16 %v1619, %v1619
    %v1624 = vpack.c.bf16 %v1620, %v1620
    %v1625 = vld [vmem:[#allocation8] sm:$0xf]
    %v1626 = vld [vmem:[#allocation8 + $0x4] sm:$0xf]
    %v1627 = vld [vmem:[#allocation8 + $0x8] sm:$0xf]
    %v1628 = vld [vmem:[#allocation8 + $0xc] sm:$0xf]
    %v1629 = vld [vmem:[#allocation8 + $0x10] sm:$0xf]
    %v1630 = vld [vmem:[#allocation8 + $0x14] sm:$0xf]
    %v1631 = vld [vmem:[#allocation8 + $0x18] sm:$0xf]
    %v1632 = vld [vmem:[#allocation8 + $0x1c] sm:$0xf]
    %v1633 = vld [vmem:[#allocation8 + $0x20] sm:$0xf]
    %v1634 = vld [vmem:[#allocation8 + $0x24] sm:$0xf]
    %v1635 = vld [vmem:[#allocation8 + $0x28] sm:$0xf]
    %v1636 = vld [vmem:[#allocation8 + $0x2c] sm:$0xf]
    %v1637 = vld [vmem:[#allocation8 + $0x30] sm:$0xf]
    %v1638 = vld [vmem:[#allocation8 + $0x34] sm:$0xf]
    %v1639 = vld [vmem:[#allocation8 + $0x38] sm:$0xf]
    %v1640 = vld [vmem:[#allocation8 + $0x3c] sm:$0xf]
    %v1641 = vld [vmem:[#allocation8 + $0x40] sm:$0xf]
    %v1642 = vld [vmem:[#allocation8 + $0x44] sm:$0xf]
    %v1643 = vld [vmem:[#allocation8 + $0x48] sm:$0xf]
    %v1644 = vld [vmem:[#allocation8 + $0x4c] sm:$0xf]
    %v1645 = vld [vmem:[#allocation8 + $0x50] sm:$0xf]
    %v1646 = vld [vmem:[#allocation8 + $0x54] sm:$0xf]
    %v1647 = vld [vmem:[#allocation8 + $0x58] sm:$0xf]
    %v1648 = vld [vmem:[#allocation8 + $0x5c] sm:$0xf]
    %v1649 = vld [vmem:[#allocation8 + $0x60] sm:$0xf]
    %v1650 = vld [vmem:[#allocation8 + $0x64] sm:$0xf]
    %v1651 = vld [vmem:[#allocation8 + $0x68] sm:$0xf]
    %v1652 = vld [vmem:[#allocation8 + $0x6c] sm:$0xf]
    %v1653 = vld [vmem:[#allocation8 + $0x70] sm:$0xf]
    %v1654 = vld [vmem:[#allocation8 + $0x74] sm:$0xf]
    %v1655 = vld [vmem:[#allocation8 + $0x78] sm:$0xf]
    %v1656 = vld [vmem:[#allocation8 + $0x7c] sm:$0xf]
    %v1657 = vld [vmem:[#allocation8 + $0x80] sm:$0xf]
    %v1658 = vld [vmem:[#allocation8 + $0x84] sm:$0xf]
    %v1659 = vld [vmem:[#allocation8 + $0x88] sm:$0xf]
    %v1660 = vld [vmem:[#allocation8 + $0x8c] sm:$0xf]
    %v1661 = vld [vmem:[#allocation8 + $0x90] sm:$0xf]
    %v1662 = vld [vmem:[#allocation8 + $0x94] sm:$0xf]
    %v1663 = vld [vmem:[#allocation8 + $0x98] sm:$0xf]
    %v1664 = vld [vmem:[#allocation8 + $0x9c] sm:$0xf]
    %v1665 = vld [vmem:[#allocation8 + $0xa0] sm:$0xf]
    %v1666 = vld [vmem:[#allocation8 + $0xa4] sm:$0xf]
    %v1667 = vld [vmem:[#allocation8 + $0xa8] sm:$0xf]
    %v1668 = vld [vmem:[#allocation8 + $0xac] sm:$0xf]
    %v1669 = vld [vmem:[#allocation8 + $0xb0] sm:$0xf]
    %v1670 = vld [vmem:[#allocation8 + $0xb4] sm:$0xf]
    %v1671 = vld [vmem:[#allocation8 + $0xb8] sm:$0xf]
    %v1672 = vld [vmem:[#allocation8 + $0xbc] sm:$0xf]
    %v1673 = vld [vmem:[#allocation8 + $0xc0] sm:$0xf]
    %v1674 = vld [vmem:[#allocation8 + $0xc4] sm:$0xf]
    %v1675 = vld [vmem:[#allocation8 + $0xc8] sm:$0xf]
    %v1676 = vld [vmem:[#allocation8 + $0xcc] sm:$0xf]
    %v1677 = vld [vmem:[#allocation8 + $0xd0] sm:$0xf]
    %v1678 = vld [vmem:[#allocation8 + $0xd4] sm:$0xf]
    %v1679 = vld [vmem:[#allocation8 + $0xd8] sm:$0xf]
    %v1680 = vld [vmem:[#allocation8 + $0xdc] sm:$0xf]
    %v1681 = vld [vmem:[#allocation8 + $0xe0] sm:$0xf]
    %v1682 = vld [vmem:[#allocation8 + $0xe4] sm:$0xf]
    %v1683 = vld [vmem:[#allocation8 + $0xe8] sm:$0xf]
    %v1684 = vld [vmem:[#allocation8 + $0xec] sm:$0xf]
    %v1685 = vld [vmem:[#allocation8 + $0xf0] sm:$0xf]
    %v1686 = vld [vmem:[#allocation8 + $0xf4] sm:$0xf]
    %v1687 = vld [vmem:[#allocation8 + $0xf8] sm:$0xf]
    %v1688 = vld [vmem:[#allocation8 + $0xfc] sm:$0xf]
    %v1689 = vld [vmem:[%s4] sm:$0x1]
    %v1691 = vlaneseq
    %v1692 = vshrl.u32 %v1691, 7
    %v1693 = vsub.s32 0, %v1692
    %v1694 = vrot.slane %v1689, %v1693
    %v1760 = vunpack.c.l.b16 %v1625
    %v1761 = vunpack.c.l.b16 %v1626
    %v1762 = vunpack.c.l.b16 %v1627
    %v1763 = vunpack.c.l.b16 %v1628
    %v1764 = vunpack.c.l.b16 %v1629
    %v1765 = vunpack.c.l.b16 %v1630
    %v1766 = vunpack.c.l.b16 %v1631
    %v1767 = vunpack.c.l.b16 %v1632
    %v1768 = vunpack.c.l.b16 %v1633
    %v1769 = vunpack.c.l.b16 %v1634
    %v1770 = vunpack.c.l.b16 %v1635
    %v1771 = vunpack.c.l.b16 %v1636
    %v1772 = vunpack.c.l.b16 %v1637
    %v1773 = vunpack.c.l.b16 %v1638
    %v1774 = vunpack.c.l.b16 %v1639
    %v1775 = vunpack.c.l.b16 %v1640
    %v1776 = vunpack.c.l.b16 %v1641
    %v1777 = vunpack.c.l.b16 %v1642
    %v1778 = vunpack.c.l.b16 %v1643
    %v1779 = vunpack.c.l.b16 %v1644
    %v1780 = vunpack.c.l.b16 %v1645
    %v1781 = vunpack.c.l.b16 %v1646
    %v1782 = vunpack.c.l.b16 %v1647
    %v1783 = vunpack.c.l.b16 %v1648
    %v1784 = vunpack.c.l.b16 %v1649
    %v1785 = vunpack.c.l.b16 %v1650
    %v1786 = vunpack.c.l.b16 %v1651
    %v1787 = vunpack.c.l.b16 %v1652
    %v1788 = vunpack.c.l.b16 %v1653
    %v1789 = vunpack.c.l.b16 %v1654
    %v1790 = vunpack.c.l.b16 %v1655
    %v1791 = vunpack.c.l.b16 %v1656
    %v1792 = vunpack.c.l.b16 %v1657
    %v1793 = vunpack.c.l.b16 %v1658
    %v1794 = vunpack.c.l.b16 %v1659
    %v1795 = vunpack.c.l.b16 %v1660
    %v1796 = vunpack.c.l.b16 %v1661
    %v1797 = vunpack.c.l.b16 %v1662
    %v1798 = vunpack.c.l.b16 %v1663
    %v1799 = vunpack.c.l.b16 %v1664
    %v1800 = vunpack.c.l.b16 %v1665
    %v1801 = vunpack.c.l.b16 %v1666
    %v1802 = vunpack.c.l.b16 %v1667
    %v1803 = vunpack.c.l.b16 %v1668
    %v1804 = vunpack.c.l.b16 %v1669
    %v1805 = vunpack.c.l.b16 %v1670
    %v1806 = vunpack.c.l.b16 %v1671
    %v1807 = vunpack.c.l.b16 %v1672
    %v1808 = vunpack.c.l.b16 %v1673
    %v1809 = vunpack.c.l.b16 %v1674
    %v1810 = vunpack.c.l.b16 %v1675
    %v1811 = vunpack.c.l.b16 %v1676
    %v1812 = vunpack.c.l.b16 %v1677
    %v1813 = vunpack.c.l.b16 %v1678
    %v1814 = vunpack.c.l.b16 %v1679
    %v1815 = vunpack.c.l.b16 %v1680
    %v1816 = vunpack.c.l.b16 %v1681
    %v1817 = vunpack.c.l.b16 %v1682
    %v1818 = vunpack.c.l.b16 %v1683
    %v1819 = vunpack.c.l.b16 %v1684
    %v1820 = vunpack.c.l.b16 %v1685
    %v1821 = vunpack.c.l.b16 %v1686
    %v1822 = vunpack.c.l.b16 %v1687
    %v1823 = vunpack.c.l.b16 %v1688
    %v1824 = vpack.c.b16 %v1761, %v1760
    %v1825 = vpack.c.b16 %v1763, %v1762
    %v1826 = vpack.c.b16 %v1765, %v1764
    %v1827 = vpack.c.b16 %v1767, %v1766
    %v1828 = vpack.c.b16 %v1769, %v1768
    %v1829 = vpack.c.b16 %v1771, %v1770
    %v1830 = vpack.c.b16 %v1773, %v1772
    %v1831 = vpack.c.b16 %v1775, %v1774
    %v1832 = vpack.c.b16 %v1777, %v1776
    %v1833 = vpack.c.b16 %v1779, %v1778
    %v1834 = vpack.c.b16 %v1781, %v1780
    %v1835 = vpack.c.b16 %v1783, %v1782
    %v1836 = vpack.c.b16 %v1785, %v1784
    %v1837 = vpack.c.b16 %v1787, %v1786
    %v1838 = vpack.c.b16 %v1789, %v1788
    %v1839 = vpack.c.b16 %v1791, %v1790
    %v1840 = vpack.c.b16 %v1793, %v1792
    %v1841 = vpack.c.b16 %v1795, %v1794
    %v1842 = vpack.c.b16 %v1797, %v1796
    %v1843 = vpack.c.b16 %v1799, %v1798
    %v1844 = vpack.c.b16 %v1801, %v1800
    %v1845 = vpack.c.b16 %v1803, %v1802
    %v1846 = vpack.c.b16 %v1805, %v1804
    %v1847 = vpack.c.b16 %v1807, %v1806
    %v1848 = vpack.c.b16 %v1809, %v1808
    %v1849 = vpack.c.b16 %v1811, %v1810
    %v1850 = vpack.c.b16 %v1813, %v1812
    %v1851 = vpack.c.b16 %v1815, %v1814
    %v1852 = vpack.c.b16 %v1817, %v1816
    %v1853 = vpack.c.b16 %v1819, %v1818
    %v1854 = vpack.c.b16 %v1821, %v1820
    %v1855 = vpack.c.b16 %v1823, %v1822
    %1888 = vmatprep.subr.bf16.mxu0 0
    %1889 = vmatpush1.bf16.msra.mxu0 %v1831
    %1890 = vmatprep.subr.bf16.mxu0 0
    %1891 = vmatpush1.bf16.msra.mxu0 %v1830
    %1892 = vmatprep.subr.bf16.mxu0 0
    %1893 = vmatpush1.bf16.msra.mxu0 %v1829
    %1894 = vmatprep.subr.bf16.mxu0 0
    %1895 = vmatpush1.bf16.msra.mxu0 %v1828
    %1896 = vmatprep.subr.bf16.mxu0 0
    %1897 = vmatpush1.bf16.msra.mxu0 %v1827
    %1898 = vmatprep.subr.bf16.mxu0 0
    %1899 = vmatpush1.bf16.msra.mxu0 %v1826
    %1900 = vmatprep.subr.bf16.mxu0 0
    %1901 = vmatpush1.bf16.msra.mxu0 %v1825
    %1902 = vmatprep.subr.bf16.mxu0 0
    %1903 = vmatpush1.bf16.msra.mxu0 %v1824
    %1904 = vmatprep.subr.bf16.mxu0 0
    %1905 = vmatpush2.bf16.msra.mxu0 %v1839
    %1906 = vmatprep.subr.bf16.mxu0 0
    %1907 = vmatpush2.bf16.msra.mxu0 %v1838
    %1908 = vmatprep.subr.bf16.mxu0 0
    %1909 = vmatpush2.bf16.msra.mxu0 %v1837
    %1910 = vmatprep.subr.bf16.mxu0 0
    %1911 = vmatpush2.bf16.msra.mxu0 %v1836
    %1912 = vmatprep.subr.bf16.mxu0 0
    %1913 = vmatpush2.bf16.msra.mxu0 %v1835
    %1914 = vmatprep.subr.bf16.mxu0 0
    %1915 = vmatpush2.bf16.msra.mxu0 %v1834
    %1916 = vmatprep.subr.bf16.mxu0 0
    %1917 = vmatpush2.bf16.msra.mxu0 %v1833
    %1918 = vmatprep.subr.bf16.mxu0 0
    %1919 = vmatpush2.bf16.msra.mxu0 %v1832
    %1920 = vmatprep.mubr.bf16.mxu0 %v1622
    %1921 = vmatmul.mubr.bf16.gmra.mxu0 %v1621
    %v1922 = vpop.f32.mrf.mxu0
    %v1923 = vadd.f32 %v1694, %v1922
    %v1924 = vpop.f32.mrf.mxu0
    %v1925 = vpop.f32.mrf.mxu0
    %v1926 = vpop.f32.mrf.mxu0
    %1927 = vdwg.mxu0
    %1928 = vmatprep.subr.bf16.mxu0 0
    %1929 = vmatpush1.bf16.msra.mxu0 %v1847
    %1930 = vmatprep.subr.bf16.mxu0 0
    %1931 = vmatpush1.bf16.msra.mxu0 %v1846
    %1932 = vmatprep.subr.bf16.mxu0 0
    %1933 = vmatpush1.bf16.msra.mxu0 %v1845
    %1934 = vmatprep.subr.bf16.mxu0 0
    %1935 = vmatpush1.bf16.msra.mxu0 %v1844
    %1936 = vmatprep.subr.bf16.mxu0 0
    %1937 = vmatpush1.bf16.msra.mxu0 %v1843
    %1938 = vmatprep.subr.bf16.mxu0 0
    %1939 = vmatpush1.bf16.msra.mxu0 %v1842
    %1940 = vmatprep.subr.bf16.mxu0 0
    %1941 = vmatpush1.bf16.msra.mxu0 %v1841
    %1942 = vmatprep.subr.bf16.mxu0 0
    %1943 = vmatpush1.bf16.msra.mxu0 %v1840
    %1944 = vmatprep.subr.bf16.mxu0 0
    %1945 = vmatpush2.bf16.msra.mxu0 %v1855
    %1946 = vmatprep.subr.bf16.mxu0 0
    %1947 = vmatpush2.bf16.msra.mxu0 %v1854
    %1948 = vmatprep.subr.bf16.mxu0 0
    %1949 = vmatpush2.bf16.msra.mxu0 %v1853
    %1950 = vmatprep.subr.bf16.mxu0 0
    %1951 = vmatpush2.bf16.msra.mxu0 %v1852
    %1952 = vmatprep.subr.bf16.mxu0 0
    %1953 = vmatpush2.bf16.msra.mxu0 %v1851
    %1954 = vmatprep.subr.bf16.mxu0 0
    %1955 = vmatpush2.bf16.msra.mxu0 %v1850
    %1956 = vmatprep.subr.bf16.mxu0 0
    %1957 = vmatpush2.bf16.msra.mxu0 %v1849
    %1958 = vmatprep.subr.bf16.mxu0 0
    %1959 = vmatpush2.bf16.msra.mxu0 %v1848
    %1960 = vmatprep.mubr.bf16.mxu0 %v1624
    %1961 = vmatmul.mubr.bf16.gmra.mxu0 %v1623
    %v1962 = vpop.f32.mrf.mxu0
    %v1963 = vadd.f32 %v1923, %v1962
    %v1964 = vpop.f32.mrf.mxu0
    %v1965 = vpop.f32.mrf.mxu0
    %v1966 = vpop.f32.mrf.mxu0
    %1967 = vdwg.mxu0
    %1968 = vst [vmem:[#allocation10] sm:$0xff] %v1963
    // Predicated region
    $region38: #{neural_net_forward.1} parent=1 // pred_check
      _
    $region39: #{neural_net_forward.1} parent=1 // pred_check_branch
      %1970 = sbr.rel (0) target = $region41
    $region40: #{neural_net_forward.1} parent=1 // pred_region
      %s1972 = ssub.s32 128, 128
      %1973 = vsyncadd [#allocation4], %s1972
      %s1975 = sshll.u32 [#allocation10], 4
      %s1976 = int_to_ptr.vmem [resolvable:$true] %s1975
      %1978 = dma.vmem_to_hbm [thread:$0]  %s1976, 128, %s5, [#allocation4]
    $region41: #{neural_net_forward.1} parent=1 // pred_fallthru
      _
    // Predicated region
    $region42: #{neural_net_forward.1} parent=1 // pred_check
      _
    $region43: #{neural_net_forward.1} parent=1 // pred_check_branch
      %1980 = sbr.rel (0) target = $region45
    $region44: #{neural_net_forward.1} parent=1 // pred_region
      %1981 = dma.done [#allocation4], 128
    $region45: #{neural_net_forward.1} parent=1 // pred_fallthru
      _
    %1982 = vsyncpa [#allocation3], 1
    %1983 = vsyncpa [#allocation6], 1
    %1984 = vsyncpa [#allocation9], 1
    %1985 = vsyncpa [#allocation4], 1

</llo_original>
